<compile_context>
chip_gen: v6e
topology: v6e:2x2x1
jax: 0.10.0
libtpu: 0.0.40
codegen_flags: <defaults>
</compile_context>

<pallas_src>
import functools

import jax
import jax.numpy as jnp
from jax.experimental import pallas as pl
from jax.experimental.pallas import tpu as pltpu

LANE = 128
BN_EPS = 1e-5


def _round_up(x, m):
    return ((x + m - 1) // m) * m


def _vmem_capacity_bytes():
    try:
        return int(pltpu.get_tpu_info().vmem_capacity_bytes)
    except Exception:
        return 64 * 1024 * 1024  # conservative fallback (v7x per-TC VMEM)


# -----------------------------------------------------------------------------
# Pallas kernels
# -----------------------------------------------------------------------------
def _emit_stats(stats_ref, y_f32, *, i, tile_p, p_true, p_pad):
    """Write per-tile column sum / sum-of-squares (rows 0 and 1 of an 8-row stats block).

    Padded rows only ever live in the LAST grid tile, so the row mask is applied there only.
    NOTE: single-pass E[y^2]-E[y]^2 in f32; fine at these scales, a Welford-style combine
    would be needed for channels with huge mean/std ratios.
    """
    def store(yv):
        stats_ref[0:1, :] = jnp.sum(yv, axis=0, keepdims=True)
        stats_ref[1:2, :] = jnp.sum(yv * yv, axis=0, keepdims=True)

    if p_pad == p_true:                      # static: no padded rows at all
        store(y_f32)
    else:
        last = pl.num_programs(0) - 1

        @pl.when(i == last)
        def _():
            row = jax.lax.broadcasted_iota(jnp.int32, (tile_p, 1), 0) + i * tile_p
            store(y_f32 * (row < p_true).astype(jnp.float32))

        @pl.when(i < last)
        def _():
            store(y_f32)


def _mm_stats_kernel(x_ref, w_ref, y_ref, stats_ref, *, tile_p, p_true, p_pad):
    """First layer: y = x @ w (bf16 MXU, f32 acc); bf16 y to HBM; masked column stats."""
    i = pl.program_id(0)
    y = jnp.dot(x_ref[...], w_ref[...], preferred_element_type=jnp.float32)
    y_ref[...] = y.astype(y_ref.dtype)
    _emit_stats(stats_ref, y, i=i, tile_p=tile_p, p_true=p_true, p_pad=p_pad)


def _norm_mm_stats_kernel(y_prev_ref, scale_ref, shift_ref, w_ref, y_ref, stats_ref,
                          *, tile_p, p_true, p_pad):
    """Middle layers: x = relu(y_prev * scale + shift) (folded BN), y = x @ w, stats."""
    i = pl.program_id(0)
    # f32 elementwise path is safe on all generations (v5e has no bf16 VALU).
    x = jnp.maximum(y_prev_ref[...].astype(jnp.float32) * scale_ref[...] + shift_ref[...], 0.0)
    y = jnp.dot(x.astype(jnp.bfloat16), w_ref[...], preferred_element_type=jnp.float32)
    y_ref[...] = y.astype(y_ref.dtype)
    _emit_stats(stats_ref, y, i=i, tile_p=tile_p, p_true=p_true, p_pad=p_pad)


def _norm_maxpool_kernel(y_prev_ref, scale_ref, shift_ref, out_ref, *, nsample, gpt):
    """Last layer epilogue: folded BN + ReLU, then max over nsample (lane-dense output)."""
    scale = scale_ref[...]
    shift = shift_ref[...]
    if nsample % 8 == 0:
        x = jnp.maximum(y_prev_ref[...].astype(jnp.float32) * scale + shift, 0.0)
        c = x.shape[-1]
        out_ref[...] = jnp.max(x.reshape(gpt, nsample, c), axis=1)
    else:
        # sublane-unaligned nsample: strided per-sample slices avoid a tile-crossing reshape
        def bn_relu(k):
            v = y_prev_ref[pl.ds(k, gpt, stride=nsample), :].astype(jnp.float32)
            return jnp.maximum(v * scale + shift, 0.0)

        acc = bn_relu(0)
        for k in range(1, nsample):
            acc = jnp.maximum(acc, bn_relu(k))
        out_ref[...] = acc


# -----------------------------------------------------------------------------
# Wrapper: layer-by-layer pipeline of pallas_calls, tiled over rows
# -----------------------------------------------------------------------------
@functools.partial(jax.jit, static_argnames=("nsample", "max_tile_rows"))
def sa_mlp_pallas(x_flat, params, *, nsample, max_tile_rows=None):
    """x_flat: [P, C_in] f32 (rows of one group contiguous); params: list of (w, gamma, beta).
    Returns [G, C_out_last] f32 with G = P // nsample."""
    P, c_in = x_flat.shape
    assert P % nsample == 0
    G = P // nsample

    c_in_pad = _round_up(c_in, 16)                      # bf16 sublane pack only, NOT 128
    c_out_pads = [_round_up(w.shape[1], LANE) for (w, _, _) in params]
    c_max_pad = max(c_out_pads + [c_in_pad])

    # ---- per-generation tile sizing ------------------------------------------------------
    vmem_cap = _vmem_capacity_bytes()
    # ~3/4 of physical VMEM: 96 MiB on v5e/v6e (128 MiB), 48 MiB on v7x (64 MiB)
    vmem_limit = int(min(vmem_cap * 3 // 4, 100 * 1024 * 1024))
    dims = [c_in_pad] + c_out_pads
    # double-buffered bf16 weight block of the widest layer + headroom for BN/stats blocks
    weight_bytes = max(2 * 2 * dims[l] * dims[l + 1] for l in range(len(params)))
    budget = max(vmem_limit - weight_bytes - 4 * 1024 * 1024, 1 << 20)
    # worst (middle) layer per-row footprint with bf16 intermediates:
    #   bf16 y_prev in x2 bufs + bf16 y out x2 bufs + f32 BN temp + f32 acc + bf16 matmul operand
    bytes_per_row = c_max_pad * (2 * 2 + 2 * 2 + 4 + 4 + 2) + c_in_pad * 2 * 2
    max_rows = max(8 * nsample, budget // max(bytes_per_row, 1))
    gpt = max(8, (max_rows // nsample // 8) * 8)        # groups per tile, multiple of 8
    # keep >= ~4 grid steps so DMA double-buffering has something to overlap with and the
    # grid stays splittable across the two v7x TensorCores ("parallel" row axis).
    if G >= 4 * 8:
        gpt = min(gpt, max(8, _round_up((G + 3) // 4, 8)))
    gpt = min(gpt, _round_up(G, 8))
    if max_tile_rows is not None:
        gpt = min(gpt, max(8, (int(max_tile_rows) // nsample // 8) * 8))
    gpt = max(gpt, 8)
    g_pad = _round_up(G, gpt)
    tile_p = gpt * nsample
    p_pad = g_pad * nsample
    num_tiles = g_pad // gpt

    cparams = pltpu.CompilerParams(dimension_semantics=("parallel",),
                                   vmem_limit_bytes=vmem_limit)

    # pad + cast input (channels-last, narrow lane slab, bf16 matmul operand)
    x0 = jnp.zeros((p_pad, c_in_pad), jnp.bfloat16)
    x0 = x0.at[:P, :c_in].set(x_flat.astype(jnp.bfloat16))

    y_prev = None
    scale = shift = None
    c_prev_pad = c_in_pad
    for li, (w, gamma, beta) in enumerate(params):
        c_out = w.shape[1]
        c_out_pad = c_out_pads[li]
        w_p = jnp.zeros((c_prev_pad, c_out_pad), jnp.bfloat16)
        w_p = w_p.at[:w.shape[0], :c_out].set(w.astype(jnp.bfloat16))

        cost = pl.CostEstimate(
            flops=2 * p_pad * c_prev_pad * c_out_pad,
            transcendentals=0,
            bytes_accessed=p_pad * (c_prev_pad + c_out_pad) * 2
                           + c_prev_pad * c_out_pad * 2
                           + num_tiles * 8 * c_out_pad * 4)

        out_shapes = (jax.ShapeDtypeStruct((p_pad, c_out_pad), jnp.bfloat16),
                      jax.ShapeDtypeStruct((num_tiles * 8, c_out_pad), jnp.float32))
        out_specs = (pl.BlockSpec((tile_p, c_out_pad), lambda i: (i, 0)),
                     pl.BlockSpec((8, c_out_pad), lambda i: (i, 0)))

        if li == 0:
            kern = functools.partial(_mm_stats_kernel, tile_p=tile_p, p_true=P, p_pad=p_pad)
            in_specs = [pl.BlockSpec((tile_p, c_prev_pad), lambda i: (i, 0)),
                        pl.BlockSpec((c_prev_pad, c_out_pad), lambda i: (0, 0))]
            y, stats = pl.pallas_call(
                kern, grid=(num_tiles,), in_specs=in_specs, out_specs=out_specs,
                out_shape=out_shapes, compiler_params=cparams, cost_estimate=cost,
            )(x0, w_p)
        else:
            kern = functools.partial(_norm_mm_stats_kernel, tile_p=tile_p, p_true=P, p_pad=p_pad)
            in_specs = [pl.BlockSpec((tile_p, c_prev_pad), lambda i: (i, 0)),
                        pl.BlockSpec((1, c_prev_pad), lambda i: (0, 0)),
                        pl.BlockSpec((1, c_prev_pad), lambda i: (0, 0)),
                        pl.BlockSpec((c_prev_pad, c_out_pad), lambda i: (0, 0))]
            y, stats = pl.pallas_call(
                kern, grid=(num_tiles,), in_specs=in_specs, out_specs=out_specs,
                out_shape=out_shapes, compiler_params=cparams, cost_estimate=cost,
            )(y_prev, scale, shift, w_p)

        # global BatchNorm statistics (training mode, biased variance) from per-tile partials
        part = stats.reshape(num_tiles, 8, c_out_pad).sum(axis=0)
        mean = part[0] / float(P)
        var = jnp.maximum(part[1] / float(P) - mean * mean, 0.0)
        gamma_p = jnp.zeros((c_out_pad,), jnp.float32).at[:c_out].set(
            gamma.reshape(-1).astype(jnp.float32))
        beta_p = jnp.zeros((c_out_pad,), jnp.float32).at[:c_out].set(
            beta.reshape(-1).astype(jnp.float32))
        sc = gamma_p * jax.lax.rsqrt(var + BN_EPS)
        scale = sc.reshape(1, c_out_pad)
        shift = (beta_p - mean * sc).reshape(1, c_out_pad)

        y_prev = y
        c_prev_pad = c_out_pad

    # final folded BN + ReLU + max over nsample (lane-dense [G_pad, C_pad] f32 output slab)
    kern = functools.partial(_norm_maxpool_kernel, nsample=nsample, gpt=gpt)
    out = pl.pallas_call(
        kern,
        grid=(num_tiles,),
        in_specs=[pl.BlockSpec((tile_p, c_prev_pad), lambda i: (i, 0)),
                  pl.BlockSpec((1, c_prev_pad), lambda i: (0, 0)),
                  pl.BlockSpec((1, c_prev_pad), lambda i: (0, 0))],
        out_specs=pl.BlockSpec((gpt, c_prev_pad), lambda i: (i, 0)),
        out_shape=jax.ShapeDtypeStruct((g_pad, c_prev_pad), jnp.float32),
        compiler_params=cparams,
    )(y_prev, scale, shift)

    c_out_last = params[-1][0].shape[1]
    return out[:G, :c_out_last]


# -----------------------------------------------------------------------------
# Plain-JAX glue: FPS sampling, ball query, gathering (data-dependent indexing).
# -----------------------------------------------------------------------------
def square_distance(src, dst):
    dist = -2.0 * jnp.matmul(src, jnp.transpose(dst, (0, 2, 1)))
    dist = dist + jnp.sum(src ** 2, -1)[..., None]
    dist = dist + jnp.sum(dst ** 2, -1)[:, None, :]
    return dist


def index_points(points, idx):
    B = points.shape[0]
    C = points.shape[-1]
    idx_shape = idx.shape
    flat = idx.reshape(B, -1)
    gathered = jnp.take_along_axis(
        points, jnp.broadcast_to(flat[..., None], (B, flat.shape[1], C)), axis=1)
    return gathered.reshape(*idx_shape, C)


def farthest_point_sample(xyz, npoint):
    # TODO(synk): torch version uses a random initial point; we start at index 0 deterministically.
    B, N, _ = xyz.shape
    batch_ids = jnp.arange(B)

    def body(i, state):
        centroids, distance, farthest = state
        centroids = centroids.at[:, i].set(farthest)
        centroid = xyz[batch_ids[:, None], farthest[:, None], :]   # [B, 1, 3]
        dist = jnp.sum((xyz - centroid) ** 2, -1)
        distance = jnp.minimum(distance, dist)
        farthest = jnp.argmax(distance, axis=-1).astype(jnp.int32)
        return centroids, distance, farthest

    centroids = jnp.zeros((B, npoint), dtype=jnp.int32)
    distance = jnp.full((B, N), 1e10, dtype=xyz.dtype)
    farthest = jnp.zeros((B,), dtype=jnp.int32)
    centroids, _, _ = jax.lax.fori_loop(0, npoint, body, (centroids, distance, farthest))
    return centroids


def query_ball_point(radius, nsample, xyz, new_xyz):
    B, N, _ = xyz.shape
    S = new_xyz.shape[1]
    sqrdists = square_distance(new_xyz, xyz)                       # [B, S, N]
    group_idx = jnp.broadcast_to(jnp.arange(N, dtype=jnp.int32), (B, S, N))
    group_idx = jnp.where(sqrdists > radius ** 2, N, group_idx)
    group_idx = jnp.sort(group_idx, axis=-1)[:, :, :nsample]
    group_first = jnp.broadcast_to(group_idx[:, :, :1], group_idx.shape)
    group_idx = jnp.where(group_idx == N, group_first, group_idx)
    return group_idx


def sample_and_group(npoint, radius, nsample, xyz, points):
    B, N, C = xyz.shape
    S = npoint
    fps_idx = farthest_point_sample(xyz, npoint)                   # [B, S]
    new_xyz = index_points(xyz, fps_idx)                           # [B, S, 3]
    idx = query_ball_point(radius, nsample, xyz, new_xyz)          # [B, S, K]
    grouped_xyz = index_points(xyz, idx)                           # [B, S, K, 3]
    grouped_xyz_norm = grouped_xyz - new_xyz.reshape(B, S, 1, C)
    if points is not None:
        grouped_points = index_points(points, idx)                 # [B, S, K, D]
        new_points = jnp.concatenate([grouped_xyz_norm, grouped_points], axis=-1)
    else:
        new_points = grouped_xyz_norm
    return new_xyz, new_points


def sample_and_group_all(xyz, points):
    B, N, C = xyz.shape
    new_xyz = jnp.zeros((B, 1, C), dtype=xyz.dtype)
    grouped_xyz = xyz.reshape(B, 1, N, C)
    if points is not None:
        new_points = jnp.concatenate([grouped_xyz, points.reshape(B, 1, N, -1)], axis=-1)
    else:
        new_points = grouped_xyz
    return new_xyz, new_points


# -----------------------------------------------------------------------------
# Module wrapper
# -----------------------------------------------------------------------------
class PointNetSetAbstraction:
    def __init__(self, npoint, radius, nsample, in_channel, mlp, group_all, key,
                 max_tile_rows=None):
        self.npoint = npoint
        self.radius = radius
        self.nsample = nsample
        self.group_all = group_all
        self.max_tile_rows = max_tile_rows
        self.params = []       # (w [Cin,Cout], gamma [Cout], beta [Cout]) per layer
        self.biases = []       # conv biases kept for parity; training-mode BN cancels them exactly
        last = in_channel
        for out_c in mlp:
            key, kw, kb = jax.random.split(key, 3)
            w = jax.random.normal(kw, (last, out_c), jnp.float32) / jnp.sqrt(float(last))
            b = jax.random.normal(kb, (1, out_c), jnp.float32) * 0.1   # unused (no effect on output)
            gamma = jnp.ones((out_c,), jnp.float32)     # BatchNorm2d default init
            beta = jnp.zeros((out_c,), jnp.float32)
            self.params.append((w, gamma, beta))
            self.biases.append(b)
            last = out_c
        # TODO(synk): BatchNorm2d running_mean/running_var tracking (training-mode state update)
        # is not implemented; forward output parity only.

    def __call__(self, xyz, points):
        # xyz: [B, 3, N], points: [B, D, N] or None  (PyTorch convention)
        xyz_t = jnp.transpose(xyz, (0, 2, 1))
        points_t = jnp.transpose(points, (0, 2, 1)) if points is not None else None
        if self.group_all:
            new_xyz, new_points = sample_and_group_all(xyz_t, points_t)
        else:
            new_xyz, new_points = sample_and_group(
                self.npoint, self.radius, self.nsample, xyz_t, points_t)
        B, S, K, C = new_points.shape
        x_flat = new_points.reshape(B * S * K, C).astype(jnp.float32)
        feat = sa_mlp_pallas(x_flat, self.params, nsample=K,
                             max_tile_rows=self.max_tile_rows)        # [B*S, C_out]
        feat = feat.reshape(B, S, -1).transpose(0, 2, 1)              # [B, C_out, S]
        new_xyz = jnp.transpose(new_xyz, (0, 2, 1))                   # [B, 3, S]
        return new_xyz, feat


# -----------------------------------------------------------------------------
# Pure-JAX reference for the MLP + BN + ReLU + maxpool path (correctness check)
# -----------------------------------------------------------------------------
def _ref_mlp(new_points, params):
    B, S, K, C = new_points.shape
    x = new_points.reshape(B * S * K, C)
    for (w, gamma, beta) in params:
        y = x @ w
        mean = jnp.mean(y, axis=0)
        var = jnp.mean((y - mean) ** 2, axis=0)
        x = jnp.maximum((y - mean) * jax.lax.rsqrt(var + BN_EPS) * gamma + beta, 0.0)
    return jnp.max(x.reshape(B * S, K, -1), axis=1)


if __name__ == "__main__":
    key = jax.random.PRNGKey(0)
    k_xyz, k_pts, k_param = jax.random.split(key, 3)

    B, N, D = 2, 32, 4
    npoint, radius, nsample = 10, 0.5, 16
    xyz = jax.random.uniform(k_xyz, (B, 3, N), dtype=jnp.float32)
    points = jax.random.normal(k_pts, (B, D, N), dtype=jnp.float32)

    # max_tile_rows=128 caps the row tile so the toy problem still runs a multi-step grid
    # (exercises tiling, double-buffering and the padded-row / padded-group masking path).
    sa = PointNetSetAbstraction(npoint=npoint, radius=radius, nsample=nsample,
                                in_channel=3 + D, mlp=[16, 32],
                                group_all=False, key=k_param, max_tile_rows=128)

    new_xyz, new_feat = sa(xyz, points)
    jax.block_until_ready((new_xyz, new_feat))

    assert new_xyz.shape == (B, 3, npoint), new_xyz.shape
    assert new_feat.shape == (B, 32, npoint), new_feat.shape
    assert bool(jnp.all(jnp.isfinite(new_feat)))

    # reference check (bf16 MXU + bf16 inter-layer activations vs f32 reference -> loose tolerance)
    xyz_t = jnp.transpose(xyz, (0, 2, 1))
    pts_t = jnp.transpose(points, (0, 2, 1))
    _, new_points_ref = sample_and_group(npoint, radius, nsample, xyz_t, pts_t)
    feat_ref = _ref_mlp(new_points_ref, sa.params).reshape(B, npoint, -1).transpose(0, 2, 1)
    max_err = float(jnp.max(jnp.abs(new_feat - feat_ref)))
    assert bool(jnp.allclose(new_feat, feat_ref, atol=0.2, rtol=0.2)), max_err

    print("KERNEL_OK")
</pallas_src>

<mosaic_0001>
module attributes {stable_mosaic.version = 11 : i64} {
  func.func @_norm_maxpool_kernel(%arg0: i32, %arg1: memref<128x128xbf16, #tpu.memory_space<vmem>>, %arg2: memref<1x128xf32, #tpu.memory_space<vmem>>, %arg3: memref<1x128xf32, #tpu.memory_space<vmem>>, %arg4: memref<8x128xf32, #tpu.memory_space<vmem>>) attributes {dimension_semantics = [#tpu.dimension_semantics<parallel>], iteration_bounds = array<i64: 3>, scalar_prefetch = 0 : i64, scratch_operands = 0 : i64, tpu.core_type = #tpu.core_type<tc>, window_params = [{transform_indices = @transform_0, window_bounds = array<i64: 128, 128>}, {pipeline_mode = #tpu.pipeline_mode<synchronous>, transform_indices = @transform_1, window_bounds = array<i64: 1, 128>}, {pipeline_mode = #tpu.pipeline_mode<synchronous>, transform_indices = @transform_2, window_bounds = array<i64: 1, 128>}, {transform_indices = @transform_3, window_bounds = array<i64: 8, 128>}]} {
    %c0 = arith.constant 0 : index
    %c0_0 = arith.constant 0 : index
    %0 = vector.load %arg2[%c0, %c0_0] : memref<1x128xf32, #tpu.memory_space<vmem>>, vector<1x128xf32>
    %c0_1 = arith.constant 0 : index
    %c0_2 = arith.constant 0 : index
    %1 = vector.load %arg3[%c0_1, %c0_2] : memref<1x128xf32, #tpu.memory_space<vmem>>, vector<1x128xf32>
    %c0_3 = arith.constant 0 : index
    %c0_4 = arith.constant 0 : index
    %2 = vector.load %arg1[%c0_3, %c0_4] : memref<128x128xbf16, #tpu.memory_space<vmem>>, vector<128x128xbf16>
    %3 = arith.extf %2 : vector<128x128xbf16> to vector<128x128xf32>
    %4 = vector.broadcast %0 : vector<1x128xf32> to vector<128x128xf32>
    %5 = arith.mulf %3, %4 : vector<128x128xf32>
    %6 = vector.broadcast %1 : vector<1x128xf32> to vector<128x128xf32>
    %7 = arith.addf %5, %6 : vector<128x128xf32>
    %cst = arith.constant 0.000000e+00 : f32
    %8 = vector.broadcast %cst : f32 to vector<128x128xf32>
    %9 = arith.maximumf %7, %8 : vector<128x128xf32>
    %10 = vector.shape_cast %9 : vector<128x128xf32> to vector<8x16x128xf32>
    %cst_5 = arith.constant dense<0xFF800000> : vector<8x128xf32>
    %11 = vector.multi_reduction <maximumf>, %10, %cst_5 [1] : vector<8x16x128xf32> to vector<8x128xf32>
    %c0_6 = arith.constant 0 : index
    %c0_7 = arith.constant 0 : index
    %12 = vector.load %arg4[%c0_6, %c0_7] : memref<8x128xf32, #tpu.memory_space<vmem>>, vector<8x128xf32>
    tpu.vector_store %arg4[%c0_6, %c0_7], %11 {strides = array<i32>} : memref<8x128xf32, #tpu.memory_space<vmem>>, vector<8x128xf32>,
    return
  }
  func.func @transform_0(%arg0: i32) -> (i32, i32) {
    %c0_i32 = arith.constant 0 : i32
    %c0_i32_0 = arith.constant 0 : i32
    return %arg0, %c0_i32 : i32, i32
  }
  func.func @transform_1(%arg0: i32) -> (i32, i32) {
    %c0_i32 = arith.constant 0 : i32
    %c0_i32_0 = arith.constant 0 : i32
    %c0_i32_1 = arith.constant 0 : i32
    return %c0_i32, %c0_i32_0 : i32, i32
  }
  func.func @transform_2(%arg0: i32) -> (i32, i32) {
    %c0_i32 = arith.constant 0 : i32
    %c0_i32_0 = arith.constant 0 : i32
    %c0_i32_1 = arith.constant 0 : i32
    return %c0_i32, %c0_i32_0 : i32, i32
  }
  func.func @transform_3(%arg0: i32) -> (i32, i32) {
    %c0_i32 = arith.constant 0 : i32
    %c0_i32_0 = arith.constant 0 : i32
    return %arg0, %c0_i32 : i32, i32
  }
}

module attributes {stable_mosaic.version = 11 : i64} {
  func.func @_norm_mm_stats_kernel(%arg0: i32, %arg1: memref<128x128xbf16, #tpu.memory_space<vmem>>, %arg2: memref<1x128xf32, #tpu.memory_space<vmem>>, %arg3: memref<1x128xf32, #tpu.memory_space<vmem>>, %arg4: memref<128x128xbf16, #tpu.memory_space<vmem>>, %arg5: memref<128x128xbf16, #tpu.memory_space<vmem>>, %arg6: memref<8x128xf32, #tpu.memory_space<vmem>>) attributes {dimension_semantics = [#tpu.dimension_semantics<parallel>], iteration_bounds = array<i64: 3>, scalar_prefetch = 0 : i64, scratch_operands = 0 : i64, tpu.core_type = #tpu.core_type<tc>, window_params = [{transform_indices = @transform_0, window_bounds = array<i64: 128, 128>}, {pipeline_mode = #tpu.pipeline_mode<synchronous>, transform_indices = @transform_1, window_bounds = array<i64: 1, 128>}, {pipeline_mode = #tpu.pipeline_mode<synchronous>, transform_indices = @transform_2, window_bounds = array<i64: 1, 128>}, {pipeline_mode = #tpu.pipeline_mode<synchronous>, transform_indices = @transform_3, window_bounds = array<i64: 128, 128>}, {transform_indices = @transform_4, window_bounds = array<i64: 128, 128>}, {transform_indices = @transform_5, window_bounds = array<i64: 8, 128>}]} {
    %c0 = arith.constant 0 : index
    %c0_0 = arith.constant 0 : index
    %0 = vector.load %arg1[%c0, %c0_0] : memref<128x128xbf16, #tpu.memory_space<vmem>>, vector<128x128xbf16>
    %1 = arith.extf %0 : vector<128x128xbf16> to vector<128x128xf32>
    %c0_1 = arith.constant 0 : index
    %c0_2 = arith.constant 0 : index
    %2 = vector.load %arg2[%c0_1, %c0_2] : memref<1x128xf32, #tpu.memory_space<vmem>>, vector<1x128xf32>
    %3 = vector.broadcast %2 : vector<1x128xf32> to vector<128x128xf32>
    %4 = arith.mulf %1, %3 : vector<128x128xf32>
    %c0_3 = arith.constant 0 : index
    %c0_4 = arith.constant 0 : index
    %5 = vector.load %arg3[%c0_3, %c0_4] : memref<1x128xf32, #tpu.memory_space<vmem>>, vector<1x128xf32>
    %6 = vector.broadcast %5 : vector<1x128xf32> to vector<128x128xf32>
    %7 = arith.addf %4, %6 : vector<128x128xf32>
    %cst = arith.constant 0.000000e+00 : f32
    %8 = vector.broadcast %cst : f32 to vector<128x128xf32>
    %9 = arith.maximumf %7, %8 : vector<128x128xf32>
    %10 = arith.truncf %9 : vector<128x128xf32> to vector<128x128xbf16>
    %c0_5 = arith.constant 0 : index
    %c0_6 = arith.constant 0 : index
    %11 = vector.load %arg4[%c0_5, %c0_6] : memref<128x128xbf16, #tpu.memory_space<vmem>>, vector<128x128xbf16>
    %cst_7 = arith.constant dense<0.000000e+00> : vector<128x128xf32>
    %12 = tpu.matmul %10, %11, %cst_7 {dimension_numbers = #tpu.dot_dimension_numbers<[1], [0], [0], [1], [0, 0, 1, 1], [], []>} : vector<128x128xbf16>, vector<128x128xbf16>, vector<128x128xf32> -> vector<128x128xf32>
    %13 = arith.truncf %12 : vector<128x128xf32> to vector<128x128xbf16>
    %c0_8 = arith.constant 0 : index
    %c0_9 = arith.constant 0 : index
    %14 = vector.load %arg5[%c0_8, %c0_9] : memref<128x128xbf16, #tpu.memory_space<vmem>>, vector<128x128xbf16>
    tpu.vector_store %arg5[%c0_8, %c0_9], %13 {strides = array<i32>} : memref<128x128xbf16, #tpu.memory_space<vmem>>, vector<128x128xbf16>,
    %c2_i32 = arith.constant 2 : i32
    %15 = arith.cmpi eq, %arg0, %c2_i32 : i32
    %16 = arith.extui %15 : i1 to i32
    %c0_i32 = arith.constant 0 : i32
    %17 = arith.cmpi ne, %16, %c0_i32 : i32
    scf.if %17 {
      %21 = tpu.iota {dimensions = array<i32: 0>} : vector<128x1xi32>
      %c128_i32 = arith.constant 128 : i32
      %22 = arith.muli %arg0, %c128_i32 : i32
      %23 = vector.broadcast %22 : i32 to vector<128x1xi32>
      %24 = arith.addi %21, %23 : vector<128x1xi32>
      %c320_i32 = arith.constant 320 : i32
      %25 = vector.broadcast %c320_i32 : i32 to vector<128x1xi32>
      %26 = arith.cmpi slt, %24, %25 : vector<128x1xi32>
      %27 = arith.extui %26 : vector<128x1xi1> to vector<128x1xi32>
      %28 = arith.sitofp %27 : vector<128x1xi32> to vector<128x1xf32>
      %29 = vector.broadcast %28 : vector<128x1xf32> to vector<128x128xf32>
      %30 = arith.mulf %12, %29 : vector<128x128xf32>
      %cst_12 = arith.constant dense<0.000000e+00> : vector<128xf32>
      %31 = vector.multi_reduction <add>, %30, %cst_12 [0] : vector<128x128xf32> to vector<128xf32>
      %32 = vector.shape_cast %31 : vector<128xf32> to vector<1x128xf32>
      %c0_13 = arith.constant 0 : index
      %c0_14 = arith.constant 0 : index
      %33 = vector.load %arg6[%c0_13, %c0_14] : memref<8x128xf32, #tpu.memory_space<vmem>>, vector<1x128xf32>
      tpu.vector_store %arg6[%c0_13, %c0_14], %32 {strides = array<i32>} : memref<8x128xf32, #tpu.memory_space<vmem>>, vector<1x128xf32>,
      %34 = arith.mulf %30, %30 : vector<128x128xf32>
      %cst_15 = arith.constant dense<0.000000e+00> : vector<128xf32>
      %35 = vector.multi_reduction <add>, %34, %cst_15 [0] : vector<128x128xf32> to vector<128xf32>
      %36 = vector.shape_cast %35 : vector<128xf32> to vector<1x128xf32>
      %c1 = arith.constant 1 : index
      %c0_16 = arith.constant 0 : index
      %37 = vector.load %arg6[%c1, %c0_16] : memref<8x128xf32, #tpu.memory_space<vmem>>, vector<1x128xf32>
      tpu.vector_store %arg6[%c1, %c0_16], %36 {strides = array<i32>} : memref<8x128xf32, #tpu.memory_space<vmem>>, vector<1x128xf32>,
    } else {
    }
    %c2_i32_10 = arith.constant 2 : i32
    %18 = arith.cmpi slt, %arg0, %c2_i32_10 : i32
    %19 = arith.extui %18 : i1 to i32
    %c0_i32_11 = arith.constant 0 : i32
    %20 = arith.cmpi ne, %19, %c0_i32_11 : i32
    scf.if %20 {
      %cst_12 = arith.constant dense<0.000000e+00> : vector<128xf32>
      %21 = vector.multi_reduction <add>, %12, %cst_12 [0] : vector<128x128xf32> to vector<128xf32>
      %22 = vector.shape_cast %21 : vector<128xf32> to vector<1x128xf32>
      %c0_13 = arith.constant 0 : index
      %c0_14 = arith.constant 0 : index
      %23 = vector.load %arg6[%c0_13, %c0_14] : memref<8x128xf32, #tpu.memory_space<vmem>>, vector<1x128xf32>
      tpu.vector_store %arg6[%c0_13, %c0_14], %22 {strides = array<i32>} : memref<8x128xf32, #tpu.memory_space<vmem>>, vector<1x128xf32>,
      %24 = arith.mulf %12, %12 : vector<128x128xf32>
      %cst_15 = arith.constant dense<0.000000e+00> : vector<128xf32>
      %25 = vector.multi_reduction <add>, %24, %cst_15 [0] : vector<128x128xf32> to vector<128xf32>
      %26 = vector.shape_cast %25 : vector<128xf32> to vector<1x128xf32>
      %c1 = arith.constant 1 : index
      %c0_16 = arith.constant 0 : index
      %27 = vector.load %arg6[%c1, %c0_16] : memref<8x128xf32, #tpu.memory_space<vmem>>, vector<1x128xf32>
      tpu.vector_store %arg6[%c1, %c0_16], %26 {strides = array<i32>} : memref<8x128xf32, #tpu.memory_space<vmem>>, vector<1x128xf32>,
    } else {
    }
    return
  }
  func.func @transform_0(%arg0: i32) -> (i32, i32) {
    %c0_i32 = arith.constant 0 : i32
    %c0_i32_0 = arith.constant 0 : i32
    return %arg0, %c0_i32 : i32, i32
  }
  func.func @transform_1(%arg0: i32) -> (i32, i32) {
    %c0_i32 = arith.constant 0 : i32
    %c0_i32_0 = arith.constant 0 : i32
    %c0_i32_1 = arith.constant 0 : i32
    return %c0_i32, %c0_i32_0 : i32, i32
  }
  func.func @transform_2(%arg0: i32) -> (i32, i32) {
    %c0_i32 = arith.constant 0 : i32
    %c0_i32_0 = arith.constant 0 : i32
    %c0_i32_1 = arith.constant 0 : i32
    return %c0_i32, %c0_i32_0 : i32, i32
  }
  func.func @transform_3(%arg0: i32) -> (i32, i32) {
    %c0_i32 = arith.constant 0 : i32
    %c0_i32_0 = arith.constant 0 : i32
    %c0_i32_1 = arith.constant 0 : i32
    return %c0_i32, %c0_i32_0 : i32, i32
  }
  func.func @transform_4(%arg0: i32) -> (i32, i32) {
    %c0_i32 = arith.constant 0 : i32
    %c0_i32_0 = arith.constant 0 : i32
    return %arg0, %c0_i32 : i32, i32
  }
  func.func @transform_5(%arg0: i32) -> (i32, i32) {
    %c0_i32 = arith.constant 0 : i32
    %c0_i32_0 = arith.constant 0 : i32
    return %arg0, %c0_i32 : i32, i32
  }
}

module attributes {stable_mosaic.version = 11 : i64} {
  func.func @_mm_stats_kernel(%arg0: i32, %arg1: memref<128x16xbf16, #tpu.memory_space<vmem>>, %arg2: memref<16x128xbf16, #tpu.memory_space<vmem>>, %arg3: memref<128x128xbf16, #tpu.memory_space<vmem>>, %arg4: memref<8x128xf32, #tpu.memory_space<vmem>>) attributes {dimension_semantics = [#tpu.dimension_semantics<parallel>], iteration_bounds = array<i64: 3>, scalar_prefetch = 0 : i64, scratch_operands = 0 : i64, tpu.core_type = #tpu.core_type<tc>, window_params = [{transform_indices = @transform_0, window_bounds = array<i64: 128, 16>}, {pipeline_mode = #tpu.pipeline_mode<synchronous>, transform_indices = @transform_1, window_bounds = array<i64: 16, 128>}, {transform_indices = @transform_2, window_bounds = array<i64: 128, 128>}, {transform_indices = @transform_3, window_bounds = array<i64: 8, 128>}]} {
    %c0 = arith.constant 0 : index
    %c0_0 = arith.constant 0 : index
    %0 = vector.load %arg1[%c0, %c0_0] : memref<128x16xbf16, #tpu.memory_space<vmem>>, vector<128x16xbf16>
    %c0_1 = arith.constant 0 : index
    %c0_2 = arith.constant 0 : index
    %1 = vector.load %arg2[%c0_1, %c0_2] : memref<16x128xbf16, #tpu.memory_space<vmem>>, vector<16x128xbf16>
    %cst = arith.constant dense<0.000000e+00> : vector<128x128xf32>
    %2 = tpu.matmul %0, %1, %cst {dimension_numbers = #tpu.dot_dimension_numbers<[1], [0], [0], [1], [0, 0, 1, 1], [], []>} : vector<128x16xbf16>, vector<16x128xbf16>, vector<128x128xf32> -> vector<128x128xf32>
    %3 = arith.truncf %2 : vector<128x128xf32> to vector<128x128xbf16>
    %c0_3 = arith.constant 0 : index
    %c0_4 = arith.constant 0 : index
    %4 = vector.load %arg3[%c0_3, %c0_4] : memref<128x128xbf16, #tpu.memory_space<vmem>>, vector<128x128xbf16>
    tpu.vector_store %arg3[%c0_3, %c0_4], %3 {strides = array<i32>} : memref<128x128xbf16, #tpu.memory_space<vmem>>, vector<128x128xbf16>,
    %c2_i32 = arith.constant 2 : i32
    %5 = arith.cmpi eq, %arg0, %c2_i32 : i32
    %6 = arith.extui %5 : i1 to i32
    %c0_i32 = arith.constant 0 : i32
    %7 = arith.cmpi ne, %6, %c0_i32 : i32
    scf.if %7 {
      %11 = tpu.iota {dimensions = array<i32: 0>} : vector<128x1xi32>
      %c128_i32 = arith.constant 128 : i32
      %12 = arith.muli %arg0, %c128_i32 : i32
      %13 = vector.broadcast %12 : i32 to vector<128x1xi32>
      %14 = arith.addi %11, %13 : vector<128x1xi32>
      %c320_i32 = arith.constant 320 : i32
      %15 = vector.broadcast %c320_i32 : i32 to vector<128x1xi32>
      %16 = arith.cmpi slt, %14, %15 : vector<128x1xi32>
      %17 = arith.extui %16 : vector<128x1xi1> to vector<128x1xi32>
      %18 = arith.sitofp %17 : vector<128x1xi32> to vector<128x1xf32>
      %19 = vector.broadcast %18 : vector<128x1xf32> to vector<128x128xf32>
      %20 = arith.mulf %2, %19 : vector<128x128xf32>
      %cst_7 = arith.constant dense<0.000000e+00> : vector<128xf32>
      %21 = vector.multi_reduction <add>, %20, %cst_7 [0] : vector<128x128xf32> to vector<128xf32>
      %22 = vector.shape_cast %21 : vector<128xf32> to vector<1x128xf32>
      %c0_8 = arith.constant 0 : index
      %c0_9 = arith.constant 0 : index
      %23 = vector.load %arg4[%c0_8, %c0_9] : memref<8x128xf32, #tpu.memory_space<vmem>>, vector<1x128xf32>
      tpu.vector_store %arg4[%c0_8, %c0_9], %22 {strides = array<i32>} : memref<8x128xf32, #tpu.memory_space<vmem>>, vector<1x128xf32>,
      %24 = arith.mulf %20, %20 : vector<128x128xf32>
      %cst_10 = arith.constant dense<0.000000e+00> : vector<128xf32>
      %25 = vector.multi_reduction <add>, %24, %cst_10 [0] : vector<128x128xf32> to vector<128xf32>
      %26 = vector.shape_cast %25 : vector<128xf32> to vector<1x128xf32>
      %c1 = arith.constant 1 : index
      %c0_11 = arith.constant 0 : index
      %27 = vector.load %arg4[%c1, %c0_11] : memref<8x128xf32, #tpu.memory_space<vmem>>, vector<1x128xf32>
      tpu.vector_store %arg4[%c1, %c0_11], %26 {strides = array<i32>} : memref<8x128xf32, #tpu.memory_space<vmem>>, vector<1x128xf32>,
    } else {
    }
    %c2_i32_5 = arith.constant 2 : i32
    %8 = arith.cmpi slt, %arg0, %c2_i32_5 : i32
    %9 = arith.extui %8 : i1 to i32
    %c0_i32_6 = arith.constant 0 : i32
    %10 = arith.cmpi ne, %9, %c0_i32_6 : i32
    scf.if %10 {
      %cst_7 = arith.constant dense<0.000000e+00> : vector<128xf32>
      %11 = vector.multi_reduction <add>, %2, %cst_7 [0] : vector<128x128xf32> to vector<128xf32>
      %12 = vector.shape_cast %11 : vector<128xf32> to vector<1x128xf32>
      %c0_8 = arith.constant 0 : index
      %c0_9 = arith.constant 0 : index
      %13 = vector.load %arg4[%c0_8, %c0_9] : memref<8x128xf32, #tpu.memory_space<vmem>>, vector<1x128xf32>
      tpu.vector_store %arg4[%c0_8, %c0_9], %12 {strides = array<i32>} : memref<8x128xf32, #tpu.memory_space<vmem>>, vector<1x128xf32>,
      %14 = arith.mulf %2, %2 : vector<128x128xf32>
      %cst_10 = arith.constant dense<0.000000e+00> : vector<128xf32>
      %15 = vector.multi_reduction <add>, %14, %cst_10 [0] : vector<128x128xf32> to vector<128xf32>
      %16 = vector.shape_cast %15 : vector<128xf32> to vector<1x128xf32>
      %c1 = arith.constant 1 : index
      %c0_11 = arith.constant 0 : index
      %17 = vector.load %arg4[%c1, %c0_11] : memref<8x128xf32, #tpu.memory_space<vmem>>, vector<1x128xf32>
      tpu.vector_store %arg4[%c1, %c0_11], %16 {strides = array<i32>} : memref<8x128xf32, #tpu.memory_space<vmem>>, vector<1x128xf32>,
    } else {
    }
    return
  }
  func.func @transform_0(%arg0: i32) -> (i32, i32) {
    %c0_i32 = arith.constant 0 : i32
    %c0_i32_0 = arith.constant 0 : i32
    return %arg0, %c0_i32 : i32, i32
  }
  func.func @transform_1(%arg0: i32) -> (i32, i32) {
    %c0_i32 = arith.constant 0 : i32
    %c0_i32_0 = arith.constant 0 : i32
    %c0_i32_1 = arith.constant 0 : i32
    return %c0_i32, %c0_i32_0 : i32, i32
  }
  func.func @transform_2(%arg0: i32) -> (i32, i32) {
    %c0_i32 = arith.constant 0 : i32
    %c0_i32_0 = arith.constant 0 : i32
    return %arg0, %c0_i32 : i32, i32
  }
  func.func @transform_3(%arg0: i32) -> (i32, i32) {
    %c0_i32 = arith.constant 0 : i32
    %c0_i32_0 = arith.constant 0 : i32
    return %arg0, %c0_i32 : i32, i32
  }
}

</mosaic_0001>

<llo_original>
// kernel: sa_mlp_pallas.5
$region0: #{sa_mlp_pallas.5}
  #allocation0 [shape = 'u32[]', space=smem, size = 0x4, offset = 0x4, fixed_abs, tag = 'smem constant byte address 0x4 - core index']
  #allocation1 [shape = 'u32[144,128]{1,0:T(1,128)}', space=vmem, size = 0x12000, scoped, tag = 'internal scratch']
  %s0 = inlined_call_operand.vmem [shape: bf16[384,128], index: 0, kind: input, shape index: {}]
  %s1 = inlined_call_operand.vmem [shape: f32[1,128], index: 1, kind: input, shape index: {}]
  %s2 = inlined_call_operand.vmem [shape: f32[1,128], index: 2, kind: input, shape index: {}]
  %s3 = inlined_call_operand.hbm [shape: f32[24,128], index: 3, kind: output, shape index: {}]
  %s4 = sld [smem:[#allocation0]]
  $region45: #{sa_mlp_pallas.5} parent=0
    _
  %s6 = ssub.s32 1, %s4
  %s7 = scalar_select 0, %s6, %s4
  $region1: #{sa_mlp_pallas.5} parent=0
    #allocation2 [shape = 'u8[8192]{0}', space=vmem, size = 0x2000, scoped, tag = 'output window, operand 0']
    #allocation3 [shape = 's32[2]{0}', space=sflag, size = 0x8, scoped, tag = 'scoped memory for sa_mlp_pallas.5']
    %8 = vsyncpa [#allocation3], 0
    %s9 = scalar_lea.sflag [#allocation3], 1
    %10 = vsyncpa %s9, 0
    loop: start=0, step=1, limit=5
    $region2: #{sa_mlp_pallas.5} parent=1 // loop_pre_header
      _
    $region3: #{sa_mlp_pallas.5} parent=1 // loop_header
      %s12 = sphi 0, %s16
      %p13 = scmp.ge.s32.totalorder %s12, 5
      %s22 = sphi 0, %s24
      %s25 = sphi 0, %s22
      %s26 = sphi 0, %s25
      %s42 = sphi 0, %s26
      %s46 = sphi 0, %s46
      %s48 = sphi 0, %s46
      %s49 = sphi 0, %s48
      %s63 = sphi 0, %s49
      %s67 = sphi 0, %s67
      %s69 = sphi 0, %s67
      %s70 = sphi 0, %s69
      %s84 = sphi 0, %s70
      %s90 = sphi 0, %s92
      %s93 = sphi 0, %s90
      %s94 = sphi 0, %s93
      %s110 = sphi 0, %s94
    $region4: #{sa_mlp_pallas.5} parent=1 // loop_header_branch
      %15 = sbr.rel (%p13) target = $region8
    $region5: #{sa_mlp_pallas.5} parent=1 // loop_body
      %s17 = ssub.s32 %s12, 1
      %s18 = ssub.s32 %s12, 2
      %s19 = sadd.s32 %s12, 1
      %s20 = ssub.s32 %s12, %s19
      %p21 = scmp.eq.s32.totalorder %s20, 0
      %s23 = sadd.s32 %s22, 1
      %s24 = scalar_select %p21, %s22, %s23
      %p27 = pneg %p21
      %p28 = scmp.eq.s32.totalorder %s12, 2
      %p29 = por %p27, %p28
      %p30 = scmp.ne.s32.totalorder %s22, %s25
      %p31 = scmp.eq.s32.totalorder %s12, 0
      %p32 = por %p30, %p31
      %p33 = scmp.ne.s32.totalorder %s22, %s25
      %p34 = scmp.eq.s32.totalorder %s17, 2
      %p35 = por %p33, %p34
      %p36 = scmp.ne.s32.totalorder %s25, %s26
      %p37 = scmp.eq.s32.totalorder %s17, 0
      %p38 = por %p36, %p37
      %p39 = scmp.ne.s32.totalorder %s25, %s26
      %p40 = scmp.eq.s32.totalorder %s18, 2
      %p41 = por %p39, %p40
      %p43 = scmp.ne.s32.totalorder %s26, %s42
      %p44 = scmp.eq.s32.totalorder %s18, 0
      %p45 = por %p43, %p44
      %s47 = sadd.s32 %s46, 1
      %p50 = scmp.eq.s32.totalorder %s12, 2
      %p51 = scmp.ne.s32.totalorder %s46, %s48
      %p52 = scmp.eq.s32.totalorder %s12, 0
      %p53 = por %p51, %p52
      %p54 = scmp.ne.s32.totalorder %s46, %s48
      %p55 = scmp.eq.s32.totalorder %s17, 2
      %p56 = por %p54, %p55
      %p57 = scmp.ne.s32.totalorder %s48, %s49
      %p58 = scmp.eq.s32.totalorder %s17, 0
      %p59 = por %p57, %p58
      %p60 = scmp.ne.s32.totalorder %s48, %s49
      %p61 = scmp.eq.s32.totalorder %s18, 2
      %p62 = por %p60, %p61
      %p64 = scmp.ne.s32.totalorder %s49, %s63
      %p65 = scmp.eq.s32.totalorder %s18, 0
      %p66 = por %p64, %p65
      %s68 = sadd.s32 %s67, 1
      %p71 = scmp.eq.s32.totalorder %s12, 2
      %p72 = scmp.ne.s32.totalorder %s67, %s69
      %p73 = scmp.eq.s32.totalorder %s12, 0
      %p74 = por %p72, %p73
      %p75 = scmp.ne.s32.totalorder %s67, %s69
      %p76 = scmp.eq.s32.totalorder %s17, 2
      %p77 = por %p75, %p76
      %p78 = scmp.ne.s32.totalorder %s69, %s70
      %p79 = scmp.eq.s32.totalorder %s17, 0
      %p80 = por %p78, %p79
      %p81 = scmp.ne.s32.totalorder %s69, %s70
      %p82 = scmp.eq.s32.totalorder %s18, 2
      %p83 = por %p81, %p82
      %p85 = scmp.ne.s32.totalorder %s70, %s84
      %p86 = scmp.eq.s32.totalorder %s18, 0
      %p87 = por %p85, %p86
      %s88 = ssub.s32 %s12, %s19
      %p89 = scmp.eq.s32.totalorder %s88, 0
      %s91 = sadd.s32 %s90, 1
      %s92 = scalar_select %p89, %s90, %s91
      %p95 = pneg %p89
      %p96 = scmp.eq.s32.totalorder %s12, 2
      %p97 = por %p95, %p96
      %p98 = scmp.ne.s32.totalorder %s90, %s93
      %p99 = scmp.eq.s32.totalorder %s12, 0
      %p100 = por %p98, %p99
      %p101 = scmp.ne.s32.totalorder %s90, %s93
      %p102 = scmp.eq.s32.totalorder %s17, 2
      %p103 = por %p101, %p102
      %p104 = scmp.ne.s32.totalorder %s93, %s94
      %p105 = scmp.eq.s32.totalorder %s17, 0
      %p106 = por %p104, %p105
      %p107 = scmp.ne.s32.totalorder %s93, %s94
      %p108 = scmp.eq.s32.totalorder %s18, 2
      %p109 = por %p107, %p108
      %p111 = scmp.ne.s32.totalorder %s94, %s110
      %p112 = scmp.eq.s32.totalorder %s18, 0
      %p113 = por %p111, %p112
      %p114 = scmp.le.s32.totalorder 1, %s12
      %p115 = scmp.lt.s32.totalorder %s12, 4
      %p116 = pnand %p114, %p115
      %p117 = pneg %p116
      // Predicated region
      $region9: #{sa_mlp_pallas.5} parent=5 // pred_check
        _
      $region10: #{sa_mlp_pallas.5} parent=5 // pred_check_branch
        %119 = sbr.rel (%p116) target = $region12
      $region11: #{sa_mlp_pallas.5} parent=5 // pred_region
        %s120 = ssub.s32 %s12, 1
        // Predicated region
        $region13: #{sa_mlp_pallas.5} parent=11 // pred_check
          %p121 = pneg %p59
        $region14: #{sa_mlp_pallas.5} parent=11 // pred_check_branch
          %123 = sbr.rel (%p121) target = $region16
        $region15: #{sa_mlp_pallas.5} parent=11 // pred_region
          _
        $region16: #{sa_mlp_pallas.5} parent=11 // pred_fallthru
          _
        // Predicated region
        $region17: #{sa_mlp_pallas.5} parent=11 // pred_check
          %p124 = pneg %p80
        $region18: #{sa_mlp_pallas.5} parent=11 // pred_check_branch
          %126 = sbr.rel (%p124) target = $region20
        $region19: #{sa_mlp_pallas.5} parent=11 // pred_region
          _
        $region20: #{sa_mlp_pallas.5} parent=11 // pred_fallthru
          _
      $region12: #{sa_mlp_pallas.5} parent=5 // pred_fallthru
        _
      %p127 = scmp.lt.s32.totalorder %s12, 3
      // Predicated region
      $region21: #{sa_mlp_pallas.5} parent=5 // pred_check
        %p128 = pneg %p127
      $region22: #{sa_mlp_pallas.5} parent=5 // pred_check_branch
        %130 = sbr.rel (%p128) target = $region24
      $region23: #{sa_mlp_pallas.5} parent=5 // pred_region
        // Predicated region
        $region25: #{sa_mlp_pallas.5} parent=23 // pred_check
          %p131 = pneg %p32
        $region26: #{sa_mlp_pallas.5} parent=23 // pred_check_branch
          %133 = sbr.rel (%p131) target = $region28
        $region27: #{sa_mlp_pallas.5} parent=23 // pred_region
          %s134 = smul.u32 16, %s12
          %p135 = scmp.lt.s32.totalorder %s134, 47
          %s136 = scalar_select %p135, %s134, 47
          %s137 = smul.addr %s136, 4
          %s138 = scalar_lea.vmem %s0, %s137
          %s139 = smul.u32 16, %s12
        $region28: #{sa_mlp_pallas.5} parent=23 // pred_fallthru
          _
      $region24: #{sa_mlp_pallas.5} parent=5 // pred_fallthru
        _
      %p140 = scmp.le.s32.totalorder 1, %s12
      %p141 = scmp.lt.s32.totalorder %s12, 4
      %p142 = pnand %p140, %p141
      %p143 = pneg %p142
      // Predicated region
      $region29: #{sa_mlp_pallas.5} parent=5 // pred_check
        _
      $region30: #{sa_mlp_pallas.5} parent=5 // pred_check_branch
        %145 = sbr.rel (%p142) target = $region32
      $region31: #{sa_mlp_pallas.5} parent=5 // pred_region
        %s146 = ssub.s32 %s12, 1
        %s147 = smul.u32 16, %s17
        %p148 = scmp.lt.s32.totalorder %s147, 47
        %s149 = scalar_select %p148, %s147, 47
        %s150 = smul.addr %s149, 4
        %s151 = scalar_lea.vmem %s0, %s150
        %p152 = pneg %p38
        %p153 = pneg %p35
        %p154 = pneg %p59
        %p155 = pneg %p56
        %p156 = pneg %p80
        %p157 = pneg %p77
        %p158 = pneg %p106
        %p159 = pneg %p103
        %s160 = sand.u32 %s93, 1
        %s161 = scalar_lea.sflag [#allocation3], %s160
        %s162 = sand.u32 %s93, 1
        %s163 = smul.addr %s162, 8
        %s164 = scalar_lea.vmem [#allocation2], %s163
        %s165 = smul.u32 16, %s17
        %p166 = scmp.lt.s32.totalorder %s165, 47
        %s167 = scalar_select %p166, %s165, 47
        %s168 = smul.addr %s167, 4
        %s169 = scalar_lea.vmem %s0, %s168
        %s170 = smul.u32 16, %s17
        %v171 = vld [vmem:[%s1] sm:$0x1]
        %v172 = vld [vmem:[%s2] sm:$0x1]
        %v173 = vld [vmem:[%s169] sm:$0xf]
        %v174 = vld [vmem:[%s169 + $0x4] sm:$0xf]
        %v175 = vld [vmem:[%s169 + $0x8] sm:$0xf]
        %v176 = vld [vmem:[%s169 + $0xc] sm:$0xf]
        %v177 = vld [vmem:[%s169 + $0x10] sm:$0xf]
        %v178 = vld [vmem:[%s169 + $0x14] sm:$0xf]
        %v179 = vld [vmem:[%s169 + $0x18] sm:$0xf]
        %v180 = vld [vmem:[%s169 + $0x1c] sm:$0xf]
        %v181 = vld [vmem:[%s169 + $0x20] sm:$0xf]
        %v182 = vld [vmem:[%s169 + $0x24] sm:$0xf]
        %v183 = vld [vmem:[%s169 + $0x28] sm:$0xf]
        %v184 = vld [vmem:[%s169 + $0x2c] sm:$0xf]
        %v185 = vld [vmem:[%s169 + $0x30] sm:$0xf]
        %v186 = vld [vmem:[%s169 + $0x34] sm:$0xf]
        %v187 = vld [vmem:[%s169 + $0x38] sm:$0xf]
        %v188 = vld [vmem:[%s169 + $0x3c] sm:$0xf]
        %v189 = vunpack.c.l.bf16 %v173
        %v190 = vunpack.c.l.bf16 %v174
        %v191 = vunpack.c.l.bf16 %v175
        %v192 = vunpack.c.l.bf16 %v176
        %v193 = vunpack.c.l.bf16 %v177
        %v194 = vunpack.c.l.bf16 %v178
        %v195 = vunpack.c.l.bf16 %v179
        %v196 = vunpack.c.l.bf16 %v180
        %v197 = vunpack.c.l.bf16 %v181
        %v198 = vunpack.c.l.bf16 %v182
        %v199 = vunpack.c.l.bf16 %v183
        %v200 = vunpack.c.l.bf16 %v184
        %v201 = vunpack.c.l.bf16 %v185
        %v202 = vunpack.c.l.bf16 %v186
        %v203 = vunpack.c.l.bf16 %v187
        %v204 = vunpack.c.l.bf16 %v188
        %v206 = vlaneseq
        %v207 = vshrl.u32 %v206, 7
        %v208 = vsub.s32 0, %v207
        %v209 = vrot.slane %v171, %v208
        %v211 = vmul.f32 %v189, %v209
        %v212 = vmul.f32 %v190, %v209
        %v213 = vmul.f32 %v191, %v209
        %v214 = vmul.f32 %v192, %v209
        %v215 = vmul.f32 %v193, %v209
        %v216 = vmul.f32 %v194, %v209
        %v217 = vmul.f32 %v195, %v209
        %v218 = vmul.f32 %v196, %v209
        %v219 = vmul.f32 %v197, %v209
        %v220 = vmul.f32 %v198, %v209
        %v221 = vmul.f32 %v199, %v209
        %v222 = vmul.f32 %v200, %v209
        %v223 = vmul.f32 %v201, %v209
        %v224 = vmul.f32 %v202, %v209
        %v225 = vmul.f32 %v203, %v209
        %v226 = vmul.f32 %v204, %v209
        %v228 = vlaneseq
        %v229 = vshrl.u32 %v228, 7
        %v230 = vsub.s32 0, %v229
        %v231 = vrot.slane %v172, %v230
        %v233 = vadd.f32 %v211, %v231
        %v234 = vadd.f32 %v212, %v231
        %v235 = vadd.f32 %v213, %v231
        %v236 = vadd.f32 %v214, %v231
        %v237 = vadd.f32 %v215, %v231
        %v238 = vadd.f32 %v216, %v231
        %v239 = vadd.f32 %v217, %v231
        %v240 = vadd.f32 %v218, %v231
        %v241 = vadd.f32 %v219, %v231
        %v242 = vadd.f32 %v220, %v231
        %v243 = vadd.f32 %v221, %v231
        %v244 = vadd.f32 %v222, %v231
        %v245 = vadd.f32 %v223, %v231
        %v246 = vadd.f32 %v224, %v231
        %v247 = vadd.f32 %v225, %v231
        %v248 = vadd.f32 %v226, %v231
        %v249 = vmax.f32 %v233, 0.0
        %v250 = vmax.f32 %v234, 0.0
        %v251 = vmax.f32 %v235, 0.0
        %v252 = vmax.f32 %v236, 0.0
        %v253 = vmax.f32 %v237, 0.0
        %v254 = vmax.f32 %v238, 0.0
        %v255 = vmax.f32 %v239, 0.0
        %v256 = vmax.f32 %v240, 0.0
        %v257 = vmax.f32 %v241, 0.0
        %v258 = vmax.f32 %v242, 0.0
        %v259 = vmax.f32 %v243, 0.0
        %v260 = vmax.f32 %v244, 0.0
        %v261 = vmax.f32 %v245, 0.0
        %v262 = vmax.f32 %v246, 0.0
        %v263 = vmax.f32 %v247, 0.0
        %v264 = vmax.f32 %v248, 0.0
        %v265 = vmax.f32 %v249, %v250
        %v266 = vrot.slane %v265, 4
        %v267 = vmax.f32 %v265, %v266
        %v268 = vrot.slane %v267, 2
        %v269 = vmax.f32 %v267, %v268
        %v270 = vrot.slane %v269, 1
        %v271 = vmax.f32 %v269, %v270
        %v272 = vmax.f32 %v251, %v252
        %v273 = vrot.slane %v272, 4
        %v274 = vmax.f32 %v272, %v273
        %v275 = vrot.slane %v274, 2
        %v276 = vmax.f32 %v274, %v275
        %v277 = vrot.slane %v276, 1
        %v278 = vmax.f32 %v276, %v277
        %v279 = vmax.f32 %v253, %v254
        %v280 = vrot.slane %v279, 4
        %v281 = vmax.f32 %v279, %v280
        %v282 = vrot.slane %v281, 2
        %v283 = vmax.f32 %v281, %v282
        %v284 = vrot.slane %v283, 1
        %v285 = vmax.f32 %v283, %v284
        %v286 = vmax.f32 %v255, %v256
        %v287 = vrot.slane %v286, 4
        %v288 = vmax.f32 %v286, %v287
        %v289 = vrot.slane %v288, 2
        %v290 = vmax.f32 %v288, %v289
        %v291 = vrot.slane %v290, 1
        %v292 = vmax.f32 %v290, %v291
        %v293 = vmax.f32 %v257, %v258
        %v294 = vrot.slane %v293, 4
        %v295 = vmax.f32 %v293, %v294
        %v296 = vrot.slane %v295, 2
        %v297 = vmax.f32 %v295, %v296
        %v298 = vrot.slane %v297, 1
        %v299 = vmax.f32 %v297, %v298
        %v300 = vmax.f32 %v259, %v260
        %v301 = vrot.slane %v300, 4
        %v302 = vmax.f32 %v300, %v301
        %v303 = vrot.slane %v302, 2
        %v304 = vmax.f32 %v302, %v303
        %v305 = vrot.slane %v304, 1
        %v306 = vmax.f32 %v304, %v305
        %v307 = vmax.f32 %v261, %v262
        %v308 = vrot.slane %v307, 4
        %v309 = vmax.f32 %v307, %v308
        %v310 = vrot.slane %v309, 2
        %v311 = vmax.f32 %v309, %v310
        %v312 = vrot.slane %v311, 1
        %v313 = vmax.f32 %v311, %v312
        %v314 = vmax.f32 %v263, %v264
        %v315 = vrot.slane %v314, 4
        %v316 = vmax.f32 %v314, %v315
        %v317 = vrot.slane %v316, 2
        %v318 = vmax.f32 %v316, %v317
        %v319 = vrot.slane %v318, 1
        %v320 = vmax.f32 %v318, %v319
        %vm329 = vcmask 1041409
        %v330 = vsel %vm329, %v278, %v271
        %vm331 = vcmask 1042434
        %v332 = vsel %vm331, %v285, %v330
        %vm333 = vcmask 1043459
        %v334 = vsel %vm333, %v292, %v332
        %vm335 = vcmask 1044484
        %v336 = vsel %vm335, %v299, %v334
        %vm337 = vcmask 1045509
        %v338 = vsel %vm337, %v306, %v336
        %vm339 = vcmask 1046534
        %v340 = vsel %vm339, %v313, %v338
        %vm341 = vcmask 1047559
        %v342 = vsel %vm341, %v320, %v340
        %344 = vst [vmem:[%s164] sm:$0xff] %v342
        %s345 = sand.u32 %s93, 1
        %s346 = scalar_lea.sflag [#allocation3], %s345
        %s347 = sand.u32 %s93, 1
        %s348 = smul.addr %s347, 8
        %s349 = scalar_lea.vmem [#allocation2], %s348
        // Predicated region
        $region33: #{sa_mlp_pallas.5} parent=31 // pred_check
          %p350 = pneg %p103
        $region34: #{sa_mlp_pallas.5} parent=31 // pred_check_branch
          %352 = sbr.rel (%p350) target = $region36
        $region35: #{sa_mlp_pallas.5} parent=31 // pred_region
          %s354 = ssub.s32 128, 128
          %355 = vsyncadd %s346, %s354
          %s356 = smul.addr %s17, 128
          %s357 = scalar_lea.hbm %s3, %s356
          %s359 = sshll.u32 %s349, 4
          %s360 = int_to_ptr.vmem [resolvable:$true] %s359
          %362 = dma.vmem_to_hbm [thread:$0]  %s360, 128, %s357, %s346
        $region36: #{sa_mlp_pallas.5} parent=31 // pred_fallthru
          _
      $region32: #{sa_mlp_pallas.5} parent=5 // pred_fallthru
        _
      %p363 = scmp.le.s32.totalorder 2, %s12
      // Predicated region
      $region37: #{sa_mlp_pallas.5} parent=5 // pred_check
        %p364 = pneg %p363
      $region38: #{sa_mlp_pallas.5} parent=5 // pred_check_branch
        %366 = sbr.rel (%p364) target = $region40
      $region39: #{sa_mlp_pallas.5} parent=5 // pred_region
        %s367 = ssub.s32 %s12, 2
        // Predicated region
        $region41: #{sa_mlp_pallas.5} parent=39 // pred_check
          %p368 = pneg %p109
        $region42: #{sa_mlp_pallas.5} parent=39 // pred_check_branch
          %370 = sbr.rel (%p368) target = $region44
        $region43: #{sa_mlp_pallas.5} parent=39 // pred_region
          %s371 = sand.u32 %s94, 1
          %s372 = scalar_lea.sflag [#allocation3], %s371
          %s373 = sand.u32 %s94, 1
          %s374 = smul.addr %s373, 8
          %s375 = scalar_lea.vmem [#allocation2], %s374
          %376 = dma.done %s372, 128
        $region44: #{sa_mlp_pallas.5} parent=39 // pred_fallthru
          _
      $region40: #{sa_mlp_pallas.5} parent=5 // pred_fallthru
        _
    $region6: #{sa_mlp_pallas.5} parent=1 // loop_footer
      %s16 = sadd.s32 1, %s12
    $region7: #{sa_mlp_pallas.5} parent=1 // loop_footer_branch
      %11 = sbr.rel target = $region3
    $region8: #{sa_mlp_pallas.5} parent=1 // loop_exit
      _
    %377 = vsyncpa [#allocation3], 1
    %s378 = scalar_lea.sflag [#allocation3], 1
    %379 = vsyncpa %s378, 1

// kernel: sa_mlp_pallas.4
$region0: #{sa_mlp_pallas.4}
  #allocation0 [shape = 'u32[]', space=smem, size = 0x4, offset = 0x4, fixed_abs, tag = 'smem constant byte address 0x4 - core index']
  #allocation1 [shape = 'u32[144,128]{1,0:T(1,128)}', space=vmem, size = 0x12000, scoped, tag = 'internal scratch']
  %s0 = inlined_call_operand.vmem [shape: bf16[384,128], index: 0, kind: input, shape index: {}]
  %s1 = inlined_call_operand.vmem [shape: f32[1,128], index: 1, kind: input, shape index: {}]
  %s2 = inlined_call_operand.vmem [shape: f32[1,128], index: 2, kind: input, shape index: {}]
  %s3 = inlined_call_operand.vmem [shape: bf16[128,128], index: 3, kind: input, shape index: {}]
  %s4 = inlined_call_operand.vmem [shape: bf16[384,128], index: 4, kind: output, shape index: {0}]
  %s5 = inlined_call_operand.vmem [shape: f32[24,128], index: 5, kind: output, shape index: {1}]
  %6 = xla_tuple %s4, %s5
  %s7 = sld [smem:[#allocation0]]
  $region65: #{sa_mlp_pallas.4} parent=0
    _
  %s9 = ssub.s32 1, %s7
  %s10 = scalar_select 0, %s9, %s7
  loop: start=0, step=1, limit=5
  $region2: #{sa_mlp_pallas.4} parent=0 // loop_pre_header
    _
  $region3: #{sa_mlp_pallas.4} parent=0 // loop_header
    %s12 = sphi 0, %s16
    %p13 = scmp.ge.s32.totalorder %s12, 5
    %s22 = sphi 0, %s24
    %s25 = sphi 0, %s22
    %s26 = sphi 0, %s25
    %s42 = sphi 0, %s26
    %s46 = sphi 0, %s46
    %s48 = sphi 0, %s46
    %s49 = sphi 0, %s48
    %s63 = sphi 0, %s49
    %s67 = sphi 0, %s67
    %s69 = sphi 0, %s67
    %s70 = sphi 0, %s69
    %s84 = sphi 0, %s70
    %s88 = sphi 0, %s88
    %s90 = sphi 0, %s88
    %s91 = sphi 0, %s90
    %s105 = sphi 0, %s91
    %s111 = sphi 0, %s113
    %s114 = sphi 0, %s111
    %s115 = sphi 0, %s114
    %s131 = sphi 0, %s115
    %s137 = sphi 0, %s139
    %s140 = sphi 0, %s137
    %s141 = sphi 0, %s140
    %s157 = sphi 0, %s141
  $region4: #{sa_mlp_pallas.4} parent=0 // loop_header_branch
    %15 = sbr.rel (%p13) target = $region8
  $region5: #{sa_mlp_pallas.4} parent=0 // loop_body
    %s17 = ssub.s32 %s12, 1
    %s18 = ssub.s32 %s12, 2
    %s19 = sadd.s32 %s12, 1
    %s20 = ssub.s32 %s12, %s19
    %p21 = scmp.eq.s32.totalorder %s20, 0
    %s23 = sadd.s32 %s22, 1
    %s24 = scalar_select %p21, %s22, %s23
    %p27 = pneg %p21
    %p28 = scmp.eq.s32.totalorder %s12, 2
    %p29 = por %p27, %p28
    %p30 = scmp.ne.s32.totalorder %s22, %s25
    %p31 = scmp.eq.s32.totalorder %s12, 0
    %p32 = por %p30, %p31
    %p33 = scmp.ne.s32.totalorder %s22, %s25
    %p34 = scmp.eq.s32.totalorder %s17, 2
    %p35 = por %p33, %p34
    %p36 = scmp.ne.s32.totalorder %s25, %s26
    %p37 = scmp.eq.s32.totalorder %s17, 0
    %p38 = por %p36, %p37
    %p39 = scmp.ne.s32.totalorder %s25, %s26
    %p40 = scmp.eq.s32.totalorder %s18, 2
    %p41 = por %p39, %p40
    %p43 = scmp.ne.s32.totalorder %s26, %s42
    %p44 = scmp.eq.s32.totalorder %s18, 0
    %p45 = por %p43, %p44
    %s47 = sadd.s32 %s46, 1
    %p50 = scmp.eq.s32.totalorder %s12, 2
    %p51 = scmp.ne.s32.totalorder %s46, %s48
    %p52 = scmp.eq.s32.totalorder %s12, 0
    %p53 = por %p51, %p52
    %p54 = scmp.ne.s32.totalorder %s46, %s48
    %p55 = scmp.eq.s32.totalorder %s17, 2
    %p56 = por %p54, %p55
    %p57 = scmp.ne.s32.totalorder %s48, %s49
    %p58 = scmp.eq.s32.totalorder %s17, 0
    %p59 = por %p57, %p58
    %p60 = scmp.ne.s32.totalorder %s48, %s49
    %p61 = scmp.eq.s32.totalorder %s18, 2
    %p62 = por %p60, %p61
    %p64 = scmp.ne.s32.totalorder %s49, %s63
    %p65 = scmp.eq.s32.totalorder %s18, 0
    %p66 = por %p64, %p65
    %s68 = sadd.s32 %s67, 1
    %p71 = scmp.eq.s32.totalorder %s12, 2
    %p72 = scmp.ne.s32.totalorder %s67, %s69
    %p73 = scmp.eq.s32.totalorder %s12, 0
    %p74 = por %p72, %p73
    %p75 = scmp.ne.s32.totalorder %s67, %s69
    %p76 = scmp.eq.s32.totalorder %s17, 2
    %p77 = por %p75, %p76
    %p78 = scmp.ne.s32.totalorder %s69, %s70
    %p79 = scmp.eq.s32.totalorder %s17, 0
    %p80 = por %p78, %p79
    %p81 = scmp.ne.s32.totalorder %s69, %s70
    %p82 = scmp.eq.s32.totalorder %s18, 2
    %p83 = por %p81, %p82
    %p85 = scmp.ne.s32.totalorder %s70, %s84
    %p86 = scmp.eq.s32.totalorder %s18, 0
    %p87 = por %p85, %p86
    %s89 = sadd.s32 %s88, 1
    %p92 = scmp.eq.s32.totalorder %s12, 2
    %p93 = scmp.ne.s32.totalorder %s88, %s90
    %p94 = scmp.eq.s32.totalorder %s12, 0
    %p95 = por %p93, %p94
    %p96 = scmp.ne.s32.totalorder %s88, %s90
    %p97 = scmp.eq.s32.totalorder %s17, 2
    %p98 = por %p96, %p97
    %p99 = scmp.ne.s32.totalorder %s90, %s91
    %p100 = scmp.eq.s32.totalorder %s17, 0
    %p101 = por %p99, %p100
    %p102 = scmp.ne.s32.totalorder %s90, %s91
    %p103 = scmp.eq.s32.totalorder %s18, 2
    %p104 = por %p102, %p103
    %p106 = scmp.ne.s32.totalorder %s91, %s105
    %p107 = scmp.eq.s32.totalorder %s18, 0
    %p108 = por %p106, %p107
    %s109 = ssub.s32 %s12, %s19
    %p110 = scmp.eq.s32.totalorder %s109, 0
    %s112 = sadd.s32 %s111, 1
    %s113 = scalar_select %p110, %s111, %s112
    %p116 = pneg %p110
    %p117 = scmp.eq.s32.totalorder %s12, 2
    %p118 = por %p116, %p117
    %p119 = scmp.ne.s32.totalorder %s111, %s114
    %p120 = scmp.eq.s32.totalorder %s12, 0
    %p121 = por %p119, %p120
    %p122 = scmp.ne.s32.totalorder %s111, %s114
    %p123 = scmp.eq.s32.totalorder %s17, 2
    %p124 = por %p122, %p123
    %p125 = scmp.ne.s32.totalorder %s114, %s115
    %p126 = scmp.eq.s32.totalorder %s17, 0
    %p127 = por %p125, %p126
    %p128 = scmp.ne.s32.totalorder %s114, %s115
    %p129 = scmp.eq.s32.totalorder %s18, 2
    %p130 = por %p128, %p129
    %p132 = scmp.ne.s32.totalorder %s115, %s131
    %p133 = scmp.eq.s32.totalorder %s18, 0
    %p134 = por %p132, %p133
    %s135 = ssub.s32 %s12, %s19
    %p136 = scmp.eq.s32.totalorder %s135, 0
    %s138 = sadd.s32 %s137, 1
    %s139 = scalar_select %p136, %s137, %s138
    %p142 = pneg %p136
    %p143 = scmp.eq.s32.totalorder %s12, 2
    %p144 = por %p142, %p143
    %p145 = scmp.ne.s32.totalorder %s137, %s140
    %p146 = scmp.eq.s32.totalorder %s12, 0
    %p147 = por %p145, %p146
    %p148 = scmp.ne.s32.totalorder %s137, %s140
    %p149 = scmp.eq.s32.totalorder %s17, 2
    %p150 = por %p148, %p149
    %p151 = scmp.ne.s32.totalorder %s140, %s141
    %p152 = scmp.eq.s32.totalorder %s17, 0
    %p153 = por %p151, %p152
    %p154 = scmp.ne.s32.totalorder %s140, %s141
    %p155 = scmp.eq.s32.totalorder %s18, 2
    %p156 = por %p154, %p155
    %p158 = scmp.ne.s32.totalorder %s141, %s157
    %p159 = scmp.eq.s32.totalorder %s18, 0
    %p160 = por %p158, %p159
    %p161 = scmp.le.s32.totalorder 1, %s12
    %p162 = scmp.lt.s32.totalorder %s12, 4
    %p163 = pnand %p161, %p162
    %p164 = pneg %p163
    // Predicated region
    $region9: #{sa_mlp_pallas.4} parent=5 // pred_check
      _
    $region10: #{sa_mlp_pallas.4} parent=5 // pred_check_branch
      %166 = sbr.rel (%p163) target = $region12
    $region11: #{sa_mlp_pallas.4} parent=5 // pred_region
      %s167 = ssub.s32 %s12, 1
      // Predicated region
      $region13: #{sa_mlp_pallas.4} parent=11 // pred_check
        %p168 = pneg %p59
      $region14: #{sa_mlp_pallas.4} parent=11 // pred_check_branch
        %170 = sbr.rel (%p168) target = $region16
      $region15: #{sa_mlp_pallas.4} parent=11 // pred_region
        _
      $region16: #{sa_mlp_pallas.4} parent=11 // pred_fallthru
        _
      // Predicated region
      $region17: #{sa_mlp_pallas.4} parent=11 // pred_check
        %p171 = pneg %p80
      $region18: #{sa_mlp_pallas.4} parent=11 // pred_check_branch
        %173 = sbr.rel (%p171) target = $region20
      $region19: #{sa_mlp_pallas.4} parent=11 // pred_region
        _
      $region20: #{sa_mlp_pallas.4} parent=11 // pred_fallthru
        _
      // Predicated region
      $region21: #{sa_mlp_pallas.4} parent=11 // pred_check
        %p174 = pneg %p101
      $region22: #{sa_mlp_pallas.4} parent=11 // pred_check_branch
        %176 = sbr.rel (%p174) target = $region24
      $region23: #{sa_mlp_pallas.4} parent=11 // pred_region
        _
      $region24: #{sa_mlp_pallas.4} parent=11 // pred_fallthru
        _
    $region12: #{sa_mlp_pallas.4} parent=5 // pred_fallthru
      _
    %p177 = scmp.lt.s32.totalorder %s12, 3
    // Predicated region
    $region25: #{sa_mlp_pallas.4} parent=5 // pred_check
      %p178 = pneg %p177
    $region26: #{sa_mlp_pallas.4} parent=5 // pred_check_branch
      %180 = sbr.rel (%p178) target = $region28
    $region27: #{sa_mlp_pallas.4} parent=5 // pred_region
      // Predicated region
      $region29: #{sa_mlp_pallas.4} parent=27 // pred_check
        %p181 = pneg %p32
      $region30: #{sa_mlp_pallas.4} parent=27 // pred_check_branch
        %183 = sbr.rel (%p181) target = $region32
      $region31: #{sa_mlp_pallas.4} parent=27 // pred_region
        %s184 = smul.u32 16, %s12
        %p185 = scmp.lt.s32.totalorder %s184, 47
        %s186 = scalar_select %p185, %s184, 47
        %s187 = smul.addr %s186, 4
        %s188 = scalar_lea.vmem %s0, %s187
        %s189 = smul.u32 16, %s12
      $region32: #{sa_mlp_pallas.4} parent=27 // pred_fallthru
        _
    $region28: #{sa_mlp_pallas.4} parent=5 // pred_fallthru
      _
    %p190 = scmp.le.s32.totalorder 1, %s12
    %p191 = scmp.lt.s32.totalorder %s12, 4
    %p192 = pnand %p190, %p191
    %p193 = pneg %p192
    // Predicated region
    $region33: #{sa_mlp_pallas.4} parent=5 // pred_check
      _
    $region34: #{sa_mlp_pallas.4} parent=5 // pred_check_branch
      %195 = sbr.rel (%p192) target = $region36
    $region35: #{sa_mlp_pallas.4} parent=5 // pred_region
      %s196 = ssub.s32 %s12, 1
      %s197 = smul.u32 16, %s17
      %p198 = scmp.lt.s32.totalorder %s197, 47
      %s199 = scalar_select %p198, %s197, 47
      %s200 = smul.addr %s199, 4
      %s201 = scalar_lea.vmem %s0, %s200
      %p202 = pneg %p38
      %p203 = pneg %p35
      %p204 = pneg %p59
      %p205 = pneg %p56
      %p206 = pneg %p80
      %p207 = pneg %p77
      %p208 = pneg %p101
      %p209 = pneg %p98
      %p210 = pneg %p127
      %p211 = pneg %p124
      %s212 = smul.u32 16, %s17
      %p213 = scmp.lt.s32.totalorder %s212, 47
      %s214 = scalar_select %p213, %s212, 47
      %s215 = smul.addr %s214, 4
      %s216 = scalar_lea.vmem %s4, %s215
      %p217 = pneg %p153
      %p218 = pneg %p150
      %p219 = scmp.lt.s32.totalorder %s17, 2
      %s220 = scalar_select %p219, %s17, 2
      %s221 = smul.addr %s220, 8
      %s222 = scalar_lea.vmem %s5, %s221
      %s223 = smul.u32 16, %s17
      %p224 = scmp.lt.s32.totalorder %s223, 47
      %s225 = scalar_select %p224, %s223, 47
      %s226 = smul.addr %s225, 4
      %s227 = scalar_lea.vmem %s0, %s226
      %s228 = smul.u32 16, %s17
      %s229 = smul.u32 16, %s17
      %p230 = scmp.lt.s32.totalorder %s229, 47
      %s231 = scalar_select %p230, %s229, 47
      %s232 = smul.addr %s231, 4
      %s233 = scalar_lea.vmem %s4, %s232
      %s234 = smul.u32 16, %s17
      %p235 = scmp.lt.s32.totalorder %s17, 2
      %s236 = scalar_select %p235, %s17, 2
      %s237 = smul.addr %s236, 8
      %s238 = scalar_lea.vmem %s5, %s237
      %v240 = vld [vmem:[%s227] sm:$0xf]
      %v241 = vld [vmem:[%s227 + $0x4] sm:$0xf]
      %v242 = vld [vmem:[%s227 + $0x8] sm:$0xf]
      %v243 = vld [vmem:[%s227 + $0xc] sm:$0xf]
      %v244 = vld [vmem:[%s227 + $0x10] sm:$0xf]
      %v245 = vld [vmem:[%s227 + $0x14] sm:$0xf]
      %v246 = vld [vmem:[%s227 + $0x18] sm:$0xf]
      %v247 = vld [vmem:[%s227 + $0x1c] sm:$0xf]
      %v248 = vld [vmem:[%s227 + $0x20] sm:$0xf]
      %v249 = vld [vmem:[%s227 + $0x24] sm:$0xf]
      %v250 = vld [vmem:[%s227 + $0x28] sm:$0xf]
      %v251 = vld [vmem:[%s227 + $0x2c] sm:$0xf]
      %v252 = vld [vmem:[%s227 + $0x30] sm:$0xf]
      %v253 = vld [vmem:[%s227 + $0x34] sm:$0xf]
      %v254 = vld [vmem:[%s227 + $0x38] sm:$0xf]
      %v255 = vld [vmem:[%s227 + $0x3c] sm:$0xf]
      %v256 = vunpack.c.l.bf16 %v240
      %v257 = vunpack.c.l.bf16 %v241
      %v258 = vunpack.c.l.bf16 %v242
      %v259 = vunpack.c.l.bf16 %v243
      %v260 = vunpack.c.l.bf16 %v244
      %v261 = vunpack.c.l.bf16 %v245
      %v262 = vunpack.c.l.bf16 %v246
      %v263 = vunpack.c.l.bf16 %v247
      %v264 = vunpack.c.l.bf16 %v248
      %v265 = vunpack.c.l.bf16 %v249
      %v266 = vunpack.c.l.bf16 %v250
      %v267 = vunpack.c.l.bf16 %v251
      %v268 = vunpack.c.l.bf16 %v252
      %v269 = vunpack.c.l.bf16 %v253
      %v270 = vunpack.c.l.bf16 %v254
      %v271 = vunpack.c.l.bf16 %v255
      %v272 = vld [vmem:[%s1] sm:$0x1]
      %v274 = vlaneseq
      %v275 = vshrl.u32 %v274, 7
      %v276 = vsub.s32 0, %v275
      %v277 = vrot.slane %v272, %v276
      %v279 = vmul.f32 %v256, %v277
      %v280 = vmul.f32 %v257, %v277
      %v281 = vmul.f32 %v258, %v277
      %v282 = vmul.f32 %v259, %v277
      %v283 = vmul.f32 %v260, %v277
      %v284 = vmul.f32 %v261, %v277
      %v285 = vmul.f32 %v262, %v277
      %v286 = vmul.f32 %v263, %v277
      %v287 = vmul.f32 %v264, %v277
      %v288 = vmul.f32 %v265, %v277
      %v289 = vmul.f32 %v266, %v277
      %v290 = vmul.f32 %v267, %v277
      %v291 = vmul.f32 %v268, %v277
      %v292 = vmul.f32 %v269, %v277
      %v293 = vmul.f32 %v270, %v277
      %v294 = vmul.f32 %v271, %v277
      %v295 = vld [vmem:[%s2] sm:$0x1]
      %v297 = vlaneseq
      %v298 = vshrl.u32 %v297, 7
      %v299 = vsub.s32 0, %v298
      %v300 = vrot.slane %v295, %v299
      %v302 = vadd.f32 %v279, %v300
      %v303 = vadd.f32 %v280, %v300
      %v304 = vadd.f32 %v281, %v300
      %v305 = vadd.f32 %v282, %v300
      %v306 = vadd.f32 %v283, %v300
      %v307 = vadd.f32 %v284, %v300
      %v308 = vadd.f32 %v285, %v300
      %v309 = vadd.f32 %v286, %v300
      %v310 = vadd.f32 %v287, %v300
      %v311 = vadd.f32 %v288, %v300
      %v312 = vadd.f32 %v289, %v300
      %v313 = vadd.f32 %v290, %v300
      %v314 = vadd.f32 %v291, %v300
      %v315 = vadd.f32 %v292, %v300
      %v316 = vadd.f32 %v293, %v300
      %v317 = vadd.f32 %v294, %v300
      %v318 = vmax.f32 %v302, 0.0
      %v319 = vmax.f32 %v303, 0.0
      %v320 = vmax.f32 %v304, 0.0
      %v321 = vmax.f32 %v305, 0.0
      %v322 = vmax.f32 %v306, 0.0
      %v323 = vmax.f32 %v307, 0.0
      %v324 = vmax.f32 %v308, 0.0
      %v325 = vmax.f32 %v309, 0.0
      %v326 = vmax.f32 %v310, 0.0
      %v327 = vmax.f32 %v311, 0.0
      %v328 = vmax.f32 %v312, 0.0
      %v329 = vmax.f32 %v313, 0.0
      %v330 = vmax.f32 %v314, 0.0
      %v331 = vmax.f32 %v315, 0.0
      %v332 = vmax.f32 %v316, 0.0
      %v333 = vmax.f32 %v317, 0.0
      %v334 = vpack.c.bf16 %v319, %v318
      %v335 = vpack.c.bf16 %v321, %v320
      %v336 = vpack.c.bf16 %v323, %v322
      %v337 = vpack.c.bf16 %v325, %v324
      %v338 = vpack.c.bf16 %v327, %v326
      %v339 = vpack.c.bf16 %v329, %v328
      %v340 = vpack.c.bf16 %v331, %v330
      %v341 = vpack.c.bf16 %v333, %v332
      %v342 = vld [vmem:[%s3] sm:$0xf]
      %v343 = vld [vmem:[%s3 + $0x4] sm:$0xf]
      %v344 = vld [vmem:[%s3 + $0x8] sm:$0xf]
      %v345 = vld [vmem:[%s3 + $0xc] sm:$0xf]
      %v346 = vld [vmem:[%s3 + $0x10] sm:$0xf]
      %v347 = vld [vmem:[%s3 + $0x14] sm:$0xf]
      %v348 = vld [vmem:[%s3 + $0x18] sm:$0xf]
      %v349 = vld [vmem:[%s3 + $0x1c] sm:$0xf]
      %v350 = vld [vmem:[%s3 + $0x20] sm:$0xf]
      %v351 = vld [vmem:[%s3 + $0x24] sm:$0xf]
      %v352 = vld [vmem:[%s3 + $0x28] sm:$0xf]
      %v353 = vld [vmem:[%s3 + $0x2c] sm:$0xf]
      %v354 = vld [vmem:[%s3 + $0x30] sm:$0xf]
      %v355 = vld [vmem:[%s3 + $0x34] sm:$0xf]
      %v356 = vld [vmem:[%s3 + $0x38] sm:$0xf]
      %v357 = vld [vmem:[%s3 + $0x3c] sm:$0xf]
      %v374 = vunpack.c.l.b16 %v342
      %v375 = vunpack.c.l.b16 %v343
      %v376 = vunpack.c.l.b16 %v344
      %v377 = vunpack.c.l.b16 %v345
      %v378 = vunpack.c.l.b16 %v346
      %v379 = vunpack.c.l.b16 %v347
      %v380 = vunpack.c.l.b16 %v348
      %v381 = vunpack.c.l.b16 %v349
      %v382 = vunpack.c.l.b16 %v350
      %v383 = vunpack.c.l.b16 %v351
      %v384 = vunpack.c.l.b16 %v352
      %v385 = vunpack.c.l.b16 %v353
      %v386 = vunpack.c.l.b16 %v354
      %v387 = vunpack.c.l.b16 %v355
      %v388 = vunpack.c.l.b16 %v356
      %v389 = vunpack.c.l.b16 %v357
      %v390 = vpack.c.b16 %v375, %v374
      %v391 = vpack.c.b16 %v377, %v376
      %v392 = vpack.c.b16 %v379, %v378
      %v393 = vpack.c.b16 %v381, %v380
      %v394 = vpack.c.b16 %v383, %v382
      %v395 = vpack.c.b16 %v385, %v384
      %v396 = vpack.c.b16 %v387, %v386
      %v397 = vpack.c.b16 %v389, %v388
      %406 = vmatprep.subr.bf16.mxu0 0
      %407 = vmatpush1.bf16.msra.mxu0 %v397
      %408 = vmatprep.subr.bf16.mxu0 0
      %409 = vmatpush1.bf16.msra.mxu0 %v396
      %410 = vmatprep.subr.bf16.mxu0 0
      %411 = vmatpush1.bf16.msra.mxu0 %v395
      %412 = vmatprep.subr.bf16.mxu0 0
      %413 = vmatpush1.bf16.msra.mxu0 %v394
      %414 = vmatprep.subr.bf16.mxu0 0
      %415 = vmatpush1.bf16.msra.mxu0 %v393
      %416 = vmatprep.subr.bf16.mxu0 0
      %417 = vmatpush1.bf16.msra.mxu0 %v392
      %418 = vmatprep.subr.bf16.mxu0 0
      %419 = vmatpush1.bf16.msra.mxu0 %v391
      %420 = vmatprep.subr.bf16.mxu0 0
      %421 = vmatpush1.bf16.msra.mxu0 %v390
      %422 = vmatprep.subr.bf16.mxu0 0
      %423 = vmatpush2.bf16.msra.mxu0 0
      %424 = vmatprep.subr.bf16.mxu0 0
      %425 = vmatpush2.bf16.msra.mxu0 0
      %426 = vmatprep.subr.bf16.mxu0 0
      %427 = vmatpush2.bf16.msra.mxu0 0
      %428 = vmatprep.subr.bf16.mxu0 0
      %429 = vmatpush2.bf16.msra.mxu0 0
      %430 = vmatprep.subr.bf16.mxu0 0
      %431 = vmatpush2.bf16.msra.mxu0 0
      %432 = vmatprep.subr.bf16.mxu0 0
      %433 = vmatpush2.bf16.msra.mxu0 0
      %434 = vmatprep.subr.bf16.mxu0 0
      %435 = vmatpush2.bf16.msra.mxu0 0
      %436 = vmatprep.subr.bf16.mxu0 0
      %437 = vmatpush2.bf16.msra.mxu0 0
      %438 = vmatprep.mubr.bf16.mxu0 0
      %439 = vmatmul.mubr.bf16.gmra.mxu0 %v334
      %v440 = vpop.f32.mrf.mxu0
      %v441 = vadd.f32 0.0, %v440
      %v442 = vpop.f32.mrf.mxu0
      %v443 = vpop.f32.mrf.mxu0
      %v444 = vadd.f32 0.0, %v443
      %v445 = vpop.f32.mrf.mxu0
      %446 = vmatprep.mubr.bf16.mxu0 0
      %447 = vmatmul.mubr.bf16.gmra.mxu0 %v335
      %v448 = vpop.f32.mrf.mxu0
      %v449 = vadd.f32 0.0, %v448
      %v450 = vpop.f32.mrf.mxu0
      %v451 = vpop.f32.mrf.mxu0
      %v452 = vadd.f32 0.0, %v451
      %v453 = vpop.f32.mrf.mxu0
      %454 = vmatprep.mubr.bf16.mxu0 0
      %455 = vmatmul.mubr.bf16.gmra.mxu0 %v336
      %v456 = vpop.f32.mrf.mxu0
      %v457 = vadd.f32 0.0, %v456
      %v458 = vpop.f32.mrf.mxu0
      %v459 = vpop.f32.mrf.mxu0
      %v460 = vadd.f32 0.0, %v459
      %v461 = vpop.f32.mrf.mxu0
      %462 = vmatprep.mubr.bf16.mxu0 0
      %463 = vmatmul.mubr.bf16.gmra.mxu0 %v337
      %v464 = vpop.f32.mrf.mxu0
      %v465 = vadd.f32 0.0, %v464
      %v466 = vpop.f32.mrf.mxu0
      %v467 = vpop.f32.mrf.mxu0
      %v468 = vadd.f32 0.0, %v467
      %v469 = vpop.f32.mrf.mxu0
      %470 = vmatprep.mubr.bf16.mxu0 0
      %471 = vmatmul.mubr.bf16.gmra.mxu0 %v338
      %v472 = vpop.f32.mrf.mxu0
      %v473 = vadd.f32 0.0, %v472
      %v474 = vpop.f32.mrf.mxu0
      %v475 = vpop.f32.mrf.mxu0
      %v476 = vadd.f32 0.0, %v475
      %v477 = vpop.f32.mrf.mxu0
      %478 = vmatprep.mubr.bf16.mxu0 0
      %479 = vmatmul.mubr.bf16.gmra.mxu0 %v339
      %v480 = vpop.f32.mrf.mxu0
      %v481 = vadd.f32 0.0, %v480
      %v482 = vpop.f32.mrf.mxu0
      %v483 = vpop.f32.mrf.mxu0
      %v484 = vadd.f32 0.0, %v483
      %v485 = vpop.f32.mrf.mxu0
      %486 = vmatprep.mubr.bf16.mxu0 0
      %487 = vmatmul.mubr.bf16.gmra.mxu0 %v340
      %v488 = vpop.f32.mrf.mxu0
      %v489 = vadd.f32 0.0, %v488
      %v490 = vpop.f32.mrf.mxu0
      %v491 = vpop.f32.mrf.mxu0
      %v492 = vadd.f32 0.0, %v491
      %v493 = vpop.f32.mrf.mxu0
      %494 = vmatprep.mubr.bf16.mxu0 0
      %495 = vmatmul.mubr.bf16.gmra.mxu0 %v341
      %v496 = vpop.f32.mrf.mxu0
      %v497 = vadd.f32 0.0, %v496
      %v498 = vpop.f32.mrf.mxu0
      %v499 = vpop.f32.mrf.mxu0
      %v500 = vadd.f32 0.0, %v499
      %v501 = vpop.f32.mrf.mxu0
      %502 = vdwg.mxu0
      %v503 = vpack.c.bf16 %v444, %v441
      %v504 = vpack.c.bf16 %v452, %v449
      %v505 = vpack.c.bf16 %v460, %v457
      %v506 = vpack.c.bf16 %v468, %v465
      %v507 = vpack.c.bf16 %v476, %v473
      %v508 = vpack.c.bf16 %v484, %v481
      %v509 = vpack.c.bf16 %v492, %v489
      %v510 = vpack.c.bf16 %v500, %v497
      %v519 = vunpack.c.l.b16 %v503
      %v520 = vunpack.c.h.b16 %v503
      %v521 = vunpack.c.l.b16 %v504
      %v522 = vunpack.c.h.b16 %v504
      %v523 = vunpack.c.l.b16 %v505
      %v524 = vunpack.c.h.b16 %v505
      %v525 = vunpack.c.l.b16 %v506
      %v526 = vunpack.c.h.b16 %v506
      %v527 = vunpack.c.l.b16 %v507
      %v528 = vunpack.c.h.b16 %v507
      %v529 = vunpack.c.l.b16 %v508
      %v530 = vunpack.c.h.b16 %v508
      %v531 = vunpack.c.l.b16 %v509
      %v532 = vunpack.c.h.b16 %v509
      %v533 = vunpack.c.l.b16 %v510
      %v534 = vunpack.c.h.b16 %v510
      %v535 = vpack.c.b16 %v519, %v519
      %v536 = vpack.c.b16 %v520, %v520
      %v537 = vpack.c.b16 %v521, %v521
      %v538 = vpack.c.b16 %v522, %v522
      %v539 = vpack.c.b16 %v523, %v523
      %v540 = vpack.c.b16 %v524, %v524
      %v541 = vpack.c.b16 %v525, %v525
      %v542 = vpack.c.b16 %v526, %v526
      %v543 = vpack.c.b16 %v527, %v527
      %v544 = vpack.c.b16 %v528, %v528
      %v545 = vpack.c.b16 %v529, %v529
      %v546 = vpack.c.b16 %v530, %v530
      %v547 = vpack.c.b16 %v531, %v531
      %v548 = vpack.c.b16 %v532, %v532
      %v549 = vpack.c.b16 %v533, %v533
      %v550 = vpack.c.b16 %v534, %v534
      %567 = vst [vmem:[%s233] sm:$0xf] %v535
      %568 = vst [vmem:[%s233 + $0x4] sm:$0xf] %v536
      %569 = vst [vmem:[%s233 + $0x8] sm:$0xf] %v537
      %570 = vst [vmem:[%s233 + $0xc] sm:$0xf] %v538
      %571 = vst [vmem:[%s233 + $0x10] sm:$0xf] %v539
      %572 = vst [vmem:[%s233 + $0x14] sm:$0xf] %v540
      %573 = vst [vmem:[%s233 + $0x18] sm:$0xf] %v541
      %574 = vst [vmem:[%s233 + $0x1c] sm:$0xf] %v542
      %575 = vst [vmem:[%s233 + $0x20] sm:$0xf] %v543
      %576 = vst [vmem:[%s233 + $0x24] sm:$0xf] %v544
      %577 = vst [vmem:[%s233 + $0x28] sm:$0xf] %v545
      %578 = vst [vmem:[%s233 + $0x2c] sm:$0xf] %v546
      %579 = vst [vmem:[%s233 + $0x30] sm:$0xf] %v547
      %580 = vst [vmem:[%s233 + $0x34] sm:$0xf] %v548
      %581 = vst [vmem:[%s233 + $0x38] sm:$0xf] %v549
      %582 = vst [vmem:[%s233 + $0x3c] sm:$0xf] %v550
      %p583 = scmp.eq.s32.totalorder %s17, 2
      // Predicated region
      $region37: #{sa_mlp_pallas.4} parent=35 // pred_check
        %p584 = pneg %p583
      $region38: #{sa_mlp_pallas.4} parent=35 // pred_check_branch
        %586 = sbr.rel (%p584) target = $region40
      $region39: #{sa_mlp_pallas.4} parent=35 // pred_region
        %v587 = vlaneseq
        %v588 = vshrl.u32 %v587, 7
        %v589 = vadd.s32 %v588, 8
        %v590 = vadd.s32 %v588, 16
        %v591 = vadd.s32 %v588, 24
        %v592 = vadd.s32 %v588, 32
        %v593 = vadd.s32 %v588, 40
        %v594 = vadd.s32 %v588, 48
        %v595 = vadd.s32 %v588, 56
        %v596 = vadd.s32 %v588, 64
        %v597 = vadd.s32 %v588, 72
        %v598 = vadd.s32 %v588, 80
        %v599 = vadd.s32 %v588, 88
        %v600 = vadd.s32 %v588, 96
        %v601 = vadd.s32 %v588, 104
        %v602 = vadd.s32 %v588, 112
        %v603 = vadd.s32 %v588, 120
        %s604 = smul.u32 %s17, 128
        %v605 = vstv %s604
        %v606 = vadd.s32 %v588, %v605
        %v607 = vadd.s32 %v589, %v605
        %v608 = vadd.s32 %v590, %v605
        %v609 = vadd.s32 %v591, %v605
        %v610 = vadd.s32 %v592, %v605
        %v611 = vadd.s32 %v593, %v605
        %v612 = vadd.s32 %v594, %v605
        %v613 = vadd.s32 %v595, %v605
        %v614 = vadd.s32 %v596, %v605
        %v615 = vadd.s32 %v597, %v605
        %v616 = vadd.s32 %v598, %v605
        %v617 = vadd.s32 %v599, %v605
        %v618 = vadd.s32 %v600, %v605
        %v619 = vadd.s32 %v601, %v605
        %v620 = vadd.s32 %v602, %v605
        %v621 = vadd.s32 %v603, %v605
        %vm622 = vcmp.lt.s32.totalorder %v606, 320
        %vm623 = vcmp.lt.s32.totalorder %v607, 320
        %vm624 = vcmp.lt.s32.totalorder %v608, 320
        %vm625 = vcmp.lt.s32.totalorder %v609, 320
        %vm626 = vcmp.lt.s32.totalorder %v610, 320
        %vm627 = vcmp.lt.s32.totalorder %v611, 320
        %vm628 = vcmp.lt.s32.totalorder %v612, 320
        %vm629 = vcmp.lt.s32.totalorder %v613, 320
        %vm630 = vcmp.lt.s32.totalorder %v614, 320
        %vm631 = vcmp.lt.s32.totalorder %v615, 320
        %vm632 = vcmp.lt.s32.totalorder %v616, 320
        %vm633 = vcmp.lt.s32.totalorder %v617, 320
        %vm634 = vcmp.lt.s32.totalorder %v618, 320
        %vm635 = vcmp.lt.s32.totalorder %v619, 320
        %vm636 = vcmp.lt.s32.totalorder %v620, 320
        %vm637 = vcmp.lt.s32.totalorder %v621, 320
        %v638 = vsel %vm622, 1, 0
        %v639 = vsel %vm623, 1, 0
        %v640 = vsel %vm624, 1, 0
        %v641 = vsel %vm625, 1, 0
        %v642 = vsel %vm626, 1, 0
        %v643 = vsel %vm627, 1, 0
        %v644 = vsel %vm628, 1, 0
        %v645 = vsel %vm629, 1, 0
        %v646 = vsel %vm630, 1, 0
        %v647 = vsel %vm631, 1, 0
        %v648 = vsel %vm632, 1, 0
        %v649 = vsel %vm633, 1, 0
        %v650 = vsel %vm634, 1, 0
        %v651 = vsel %vm635, 1, 0
        %v652 = vsel %vm636, 1, 0
        %v653 = vsel %vm637, 1, 0
        %v654 = vcvt.s32.f32 %v638
        %v655 = vcvt.s32.f32 %v639
        %v656 = vcvt.s32.f32 %v640
        %v657 = vcvt.s32.f32 %v641
        %v658 = vcvt.s32.f32 %v642
        %v659 = vcvt.s32.f32 %v643
        %v660 = vcvt.s32.f32 %v644
        %v661 = vcvt.s32.f32 %v645
        %v662 = vcvt.s32.f32 %v646
        %v663 = vcvt.s32.f32 %v647
        %v664 = vcvt.s32.f32 %v648
        %v665 = vcvt.s32.f32 %v649
        %v666 = vcvt.s32.f32 %v650
        %v667 = vcvt.s32.f32 %v651
        %v668 = vcvt.s32.f32 %v652
        %v669 = vcvt.s32.f32 %v653
        %v670 = vmul.f32 %v441, %v654
        %v671 = vmul.f32 %v444, %v655
        %v672 = vmul.f32 %v449, %v656
        %v673 = vmul.f32 %v452, %v657
        %v674 = vmul.f32 %v457, %v658
        %v675 = vmul.f32 %v460, %v659
        %v676 = vmul.f32 %v465, %v660
        %v677 = vmul.f32 %v468, %v661
        %v678 = vmul.f32 %v473, %v662
        %v679 = vmul.f32 %v476, %v663
        %v680 = vmul.f32 %v481, %v664
        %v681 = vmul.f32 %v484, %v665
        %v682 = vmul.f32 %v489, %v666
        %v683 = vmul.f32 %v492, %v667
        %v684 = vmul.f32 %v497, %v668
        %v685 = vmul.f32 %v500, %v669
        %v686 = vadd.f32 %v670, %v671
        %v687 = vadd.f32 %v686, %v672
        %v688 = vadd.f32 %v687, %v673
        %v689 = vadd.f32 %v688, %v674
        %v690 = vadd.f32 %v689, %v675
        %v691 = vadd.f32 %v690, %v676
        %v692 = vadd.f32 %v691, %v677
        %v693 = vadd.f32 %v692, %v678
        %v694 = vadd.f32 %v693, %v679
        %v695 = vadd.f32 %v694, %v680
        %v696 = vadd.f32 %v695, %v681
        %v697 = vadd.f32 %v696, %v682
        %v698 = vadd.f32 %v697, %v683
        %v699 = vadd.f32 %v698, %v684
        %v700 = vadd.f32 %v699, %v685
        %v701 = vrot.slane %v700, 4
        %v702 = vadd.f32 %v700, %v701
        %v703 = vrot.slane %v702, 2
        %v704 = vadd.f32 %v702, %v703
        %v705 = vrot.slane %v704, 1
        %v706 = vadd.f32 %v704, %v705
        %707 = vst [vmem:[%s238] sm:$0x1] %v706
        %v708 = vmul.f32 %v670, %v670
        %v709 = vmul.f32 %v671, %v671
        %v710 = vmul.f32 %v672, %v672
        %v711 = vmul.f32 %v673, %v673
        %v712 = vmul.f32 %v674, %v674
        %v713 = vmul.f32 %v675, %v675
        %v714 = vmul.f32 %v676, %v676
        %v715 = vmul.f32 %v677, %v677
        %v716 = vmul.f32 %v678, %v678
        %v717 = vmul.f32 %v679, %v679
        %v718 = vmul.f32 %v680, %v680
        %v719 = vmul.f32 %v681, %v681
        %v720 = vmul.f32 %v682, %v682
        %v721 = vmul.f32 %v683, %v683
        %v722 = vmul.f32 %v684, %v684
        %v723 = vmul.f32 %v685, %v685
        %v724 = vadd.f32 %v708, %v709
        %v725 = vadd.f32 %v724, %v710
        %v726 = vadd.f32 %v725, %v711
        %v727 = vadd.f32 %v726, %v712
        %v728 = vadd.f32 %v727, %v713
        %v729 = vadd.f32 %v728, %v714
        %v730 = vadd.f32 %v729, %v715
        %v731 = vadd.f32 %v730, %v716
        %v732 = vadd.f32 %v731, %v717
        %v733 = vadd.f32 %v732, %v718
        %v734 = vadd.f32 %v733, %v719
        %v735 = vadd.f32 %v734, %v720
        %v736 = vadd.f32 %v735, %v721
        %v737 = vadd.f32 %v736, %v722
        %v738 = vadd.f32 %v737, %v723
        %v739 = vrot.slane %v738, 4
        %v740 = vadd.f32 %v738, %v739
        %v741 = vrot.slane %v740, 2
        %v742 = vadd.f32 %v740, %v741
        %v743 = vrot.slane %v742, 1
        %v744 = vadd.f32 %v742, %v743
        %745 = vst [vmem:[%s238 + $0x1] sm:$0x1] %v744
      $region40: #{sa_mlp_pallas.4} parent=35 // pred_fallthru
        _
      %p746 = scmp.lt.s32.totalorder %s17, 2
      // Predicated region
      $region41: #{sa_mlp_pallas.4} parent=35 // pred_check
        %p747 = pneg %p746
      $region42: #{sa_mlp_pallas.4} parent=35 // pred_check_branch
        %749 = sbr.rel (%p747) target = $region44
      $region43: #{sa_mlp_pallas.4} parent=35 // pred_region
        %v750 = vadd.f32 %v441, %v444
        %v751 = vadd.f32 %v750, %v449
        %v752 = vadd.f32 %v751, %v452
        %v753 = vadd.f32 %v752, %v457
        %v754 = vadd.f32 %v753, %v460
        %v755 = vadd.f32 %v754, %v465
        %v756 = vadd.f32 %v755, %v468
        %v757 = vadd.f32 %v756, %v473
        %v758 = vadd.f32 %v757, %v476
        %v759 = vadd.f32 %v758, %v481
        %v760 = vadd.f32 %v759, %v484
        %v761 = vadd.f32 %v760, %v489
        %v762 = vadd.f32 %v761, %v492
        %v763 = vadd.f32 %v762, %v497
        %v764 = vadd.f32 %v763, %v500
        %v765 = vrot.slane %v764, 4
        %v766 = vadd.f32 %v764, %v765
        %v767 = vrot.slane %v766, 2
        %v768 = vadd.f32 %v766, %v767
        %v769 = vrot.slane %v768, 1
        %v770 = vadd.f32 %v768, %v769
        %771 = vst [vmem:[%s238] sm:$0x1] %v770
        %v772 = vmul.f32 %v441, %v441
        %v773 = vmul.f32 %v444, %v444
        %v774 = vmul.f32 %v449, %v449
        %v775 = vmul.f32 %v452, %v452
        %v776 = vmul.f32 %v457, %v457
        %v777 = vmul.f32 %v460, %v460
        %v778 = vmul.f32 %v465, %v465
        %v779 = vmul.f32 %v468, %v468
        %v780 = vmul.f32 %v473, %v473
        %v781 = vmul.f32 %v476, %v476
        %v782 = vmul.f32 %v481, %v481
        %v783 = vmul.f32 %v484, %v484
        %v784 = vmul.f32 %v489, %v489
        %v785 = vmul.f32 %v492, %v492
        %v786 = vmul.f32 %v497, %v497
        %v787 = vmul.f32 %v500, %v500
        %v788 = vadd.f32 %v772, %v773
        %v789 = vadd.f32 %v788, %v774
        %v790 = vadd.f32 %v789, %v775
        %v791 = vadd.f32 %v790, %v776
        %v792 = vadd.f32 %v791, %v777
        %v793 = vadd.f32 %v792, %v778
        %v794 = vadd.f32 %v793, %v779
        %v795 = vadd.f32 %v794, %v780
        %v796 = vadd.f32 %v795, %v781
        %v797 = vadd.f32 %v796, %v782
        %v798 = vadd.f32 %v797, %v783
        %v799 = vadd.f32 %v798, %v784
        %v800 = vadd.f32 %v799, %v785
        %v801 = vadd.f32 %v800, %v786
        %v802 = vadd.f32 %v801, %v787
        %v803 = vrot.slane %v802, 4
        %v804 = vadd.f32 %v802, %v803
        %v805 = vrot.slane %v804, 2
        %v806 = vadd.f32 %v804, %v805
        %v807 = vrot.slane %v806, 1
        %v808 = vadd.f32 %v806, %v807
        %809 = vst [vmem:[%s238 + $0x1] sm:$0x1] %v808
      $region44: #{sa_mlp_pallas.4} parent=35 // pred_fallthru
        _
      %s810 = smul.u32 16, %s17
      %p811 = scmp.lt.s32.totalorder %s810, 47
      %s812 = scalar_select %p811, %s810, 47
      %s813 = smul.addr %s812, 4
      %s814 = scalar_lea.vmem %s4, %s813
      %p815 = scmp.lt.s32.totalorder %s17, 2
      %s816 = scalar_select %p815, %s17, 2
      %s817 = smul.addr %s816, 8
      %s818 = scalar_lea.vmem %s5, %s817
      // Predicated region
      $region45: #{sa_mlp_pallas.4} parent=35 // pred_check
        %p819 = pneg %p124
      $region46: #{sa_mlp_pallas.4} parent=35 // pred_check_branch
        %821 = sbr.rel (%p819) target = $region48
      $region47: #{sa_mlp_pallas.4} parent=35 // pred_region
        %s822 = smul.u32 16, %s17
      $region48: #{sa_mlp_pallas.4} parent=35 // pred_fallthru
        _
      // Predicated region
      $region49: #{sa_mlp_pallas.4} parent=35 // pred_check
        %p823 = pneg %p150
      $region50: #{sa_mlp_pallas.4} parent=35 // pred_check_branch
        %825 = sbr.rel (%p823) target = $region52
      $region51: #{sa_mlp_pallas.4} parent=35 // pred_region
        _
      $region52: #{sa_mlp_pallas.4} parent=35 // pred_fallthru
        _
    $region36: #{sa_mlp_pallas.4} parent=5 // pred_fallthru
      _
    %p826 = scmp.le.s32.totalorder 2, %s12
    // Predicated region
    $region53: #{sa_mlp_pallas.4} parent=5 // pred_check
      %p827 = pneg %p826
    $region54: #{sa_mlp_pallas.4} parent=5 // pred_check_branch
      %829 = sbr.rel (%p827) target = $region56
    $region55: #{sa_mlp_pallas.4} parent=5 // pred_region
      %s830 = ssub.s32 %s12, 2
      // Predicated region
      $region57: #{sa_mlp_pallas.4} parent=55 // pred_check
        %p831 = pneg %p130
      $region58: #{sa_mlp_pallas.4} parent=55 // pred_check_branch
        %833 = sbr.rel (%p831) target = $region60
      $region59: #{sa_mlp_pallas.4} parent=55 // pred_region
        %s834 = smul.u32 16, %s18
        %p835 = scmp.lt.s32.totalorder %s834, 47
        %s836 = scalar_select %p835, %s834, 47
        %s837 = smul.addr %s836, 4
        %s838 = scalar_lea.vmem %s4, %s837
      $region60: #{sa_mlp_pallas.4} parent=55 // pred_fallthru
        _
      // Predicated region
      $region61: #{sa_mlp_pallas.4} parent=55 // pred_check
        %p839 = pneg %p156
      $region62: #{sa_mlp_pallas.4} parent=55 // pred_check_branch
        %841 = sbr.rel (%p839) target = $region64
      $region63: #{sa_mlp_pallas.4} parent=55 // pred_region
        %p842 = scmp.lt.s32.totalorder %s18, 2
        %s843 = scalar_select %p842, %s18, 2
        %s844 = smul.addr %s843, 8
        %s845 = scalar_lea.vmem %s5, %s844
      $region64: #{sa_mlp_pallas.4} parent=55 // pred_fallthru
        _
    $region56: #{sa_mlp_pallas.4} parent=5 // pred_fallthru
      _
  $region6: #{sa_mlp_pallas.4} parent=0 // loop_footer
    %s16 = sadd.s32 1, %s12
  $region7: #{sa_mlp_pallas.4} parent=0 // loop_footer_branch
    %11 = sbr.rel target = $region3
  $region8: #{sa_mlp_pallas.4} parent=0 // loop_exit
    _

// kernel: sa_mlp_pallas.3
$region0: #{sa_mlp_pallas.3}
  #allocation0 [shape = 'u32[]', space=smem, size = 0x4, offset = 0x4, fixed_abs, tag = 'smem constant byte address 0x4 - core index']
  #allocation1 [shape = 'u32[144,128]{1,0:T(1,128)}', space=vmem, size = 0x12000, scoped, tag = 'internal scratch']
  %s0 = inlined_call_operand.vmem [shape: bf16[384,16], index: 0, kind: input, shape index: {}]
  %s1 = inlined_call_operand.vmem [shape: bf16[16,128], index: 1, kind: input, shape index: {}]
  %s2 = inlined_call_operand.vmem [shape: bf16[384,128], index: 2, kind: output, shape index: {0}]
  %s3 = inlined_call_operand.vmem [shape: f32[24,128], index: 3, kind: output, shape index: {1}]
  %4 = xla_tuple %s2, %s3
  %s5 = sld [smem:[#allocation0]]
  $region57: #{sa_mlp_pallas.3} parent=0
    _
  %s7 = ssub.s32 1, %s5
  %s8 = scalar_select 0, %s7, %s5
  loop: start=0, step=1, limit=5
  $region2: #{sa_mlp_pallas.3} parent=0 // loop_pre_header
    _
  $region3: #{sa_mlp_pallas.3} parent=0 // loop_header
    %s10 = sphi 0, %s14
    %p11 = scmp.ge.s32.totalorder %s10, 5
    %s20 = sphi 0, %s22
    %s23 = sphi 0, %s20
    %s24 = sphi 0, %s23
    %s40 = sphi 0, %s24
    %s44 = sphi 0, %s44
    %s46 = sphi 0, %s44
    %s47 = sphi 0, %s46
    %s61 = sphi 0, %s47
    %s67 = sphi 0, %s69
    %s70 = sphi 0, %s67
    %s71 = sphi 0, %s70
    %s87 = sphi 0, %s71
    %s93 = sphi 0, %s95
    %s96 = sphi 0, %s93
    %s97 = sphi 0, %s96
    %s113 = sphi 0, %s97
  $region4: #{sa_mlp_pallas.3} parent=0 // loop_header_branch
    %13 = sbr.rel (%p11) target = $region8
  $region5: #{sa_mlp_pallas.3} parent=0 // loop_body
    %s15 = ssub.s32 %s10, 1
    %s16 = ssub.s32 %s10, 2
    %s17 = sadd.s32 %s10, 1
    %s18 = ssub.s32 %s10, %s17
    %p19 = scmp.eq.s32.totalorder %s18, 0
    %s21 = sadd.s32 %s20, 1
    %s22 = scalar_select %p19, %s20, %s21
    %p25 = pneg %p19
    %p26 = scmp.eq.s32.totalorder %s10, 2
    %p27 = por %p25, %p26
    %p28 = scmp.ne.s32.totalorder %s20, %s23
    %p29 = scmp.eq.s32.totalorder %s10, 0
    %p30 = por %p28, %p29
    %p31 = scmp.ne.s32.totalorder %s20, %s23
    %p32 = scmp.eq.s32.totalorder %s15, 2
    %p33 = por %p31, %p32
    %p34 = scmp.ne.s32.totalorder %s23, %s24
    %p35 = scmp.eq.s32.totalorder %s15, 0
    %p36 = por %p34, %p35
    %p37 = scmp.ne.s32.totalorder %s23, %s24
    %p38 = scmp.eq.s32.totalorder %s16, 2
    %p39 = por %p37, %p38
    %p41 = scmp.ne.s32.totalorder %s24, %s40
    %p42 = scmp.eq.s32.totalorder %s16, 0
    %p43 = por %p41, %p42
    %s45 = sadd.s32 %s44, 1
    %p48 = scmp.eq.s32.totalorder %s10, 2
    %p49 = scmp.ne.s32.totalorder %s44, %s46
    %p50 = scmp.eq.s32.totalorder %s10, 0
    %p51 = por %p49, %p50
    %p52 = scmp.ne.s32.totalorder %s44, %s46
    %p53 = scmp.eq.s32.totalorder %s15, 2
    %p54 = por %p52, %p53
    %p55 = scmp.ne.s32.totalorder %s46, %s47
    %p56 = scmp.eq.s32.totalorder %s15, 0
    %p57 = por %p55, %p56
    %p58 = scmp.ne.s32.totalorder %s46, %s47
    %p59 = scmp.eq.s32.totalorder %s16, 2
    %p60 = por %p58, %p59
    %p62 = scmp.ne.s32.totalorder %s47, %s61
    %p63 = scmp.eq.s32.totalorder %s16, 0
    %p64 = por %p62, %p63
    %s65 = ssub.s32 %s10, %s17
    %p66 = scmp.eq.s32.totalorder %s65, 0
    %s68 = sadd.s32 %s67, 1
    %s69 = scalar_select %p66, %s67, %s68
    %p72 = pneg %p66
    %p73 = scmp.eq.s32.totalorder %s10, 2
    %p74 = por %p72, %p73
    %p75 = scmp.ne.s32.totalorder %s67, %s70
    %p76 = scmp.eq.s32.totalorder %s10, 0
    %p77 = por %p75, %p76
    %p78 = scmp.ne.s32.totalorder %s67, %s70
    %p79 = scmp.eq.s32.totalorder %s15, 2
    %p80 = por %p78, %p79
    %p81 = scmp.ne.s32.totalorder %s70, %s71
    %p82 = scmp.eq.s32.totalorder %s15, 0
    %p83 = por %p81, %p82
    %p84 = scmp.ne.s32.totalorder %s70, %s71
    %p85 = scmp.eq.s32.totalorder %s16, 2
    %p86 = por %p84, %p85
    %p88 = scmp.ne.s32.totalorder %s71, %s87
    %p89 = scmp.eq.s32.totalorder %s16, 0
    %p90 = por %p88, %p89
    %s91 = ssub.s32 %s10, %s17
    %p92 = scmp.eq.s32.totalorder %s91, 0
    %s94 = sadd.s32 %s93, 1
    %s95 = scalar_select %p92, %s93, %s94
    %p98 = pneg %p92
    %p99 = scmp.eq.s32.totalorder %s10, 2
    %p100 = por %p98, %p99
    %p101 = scmp.ne.s32.totalorder %s93, %s96
    %p102 = scmp.eq.s32.totalorder %s10, 0
    %p103 = por %p101, %p102
    %p104 = scmp.ne.s32.totalorder %s93, %s96
    %p105 = scmp.eq.s32.totalorder %s15, 2
    %p106 = por %p104, %p105
    %p107 = scmp.ne.s32.totalorder %s96, %s97
    %p108 = scmp.eq.s32.totalorder %s15, 0
    %p109 = por %p107, %p108
    %p110 = scmp.ne.s32.totalorder %s96, %s97
    %p111 = scmp.eq.s32.totalorder %s16, 2
    %p112 = por %p110, %p111
    %p114 = scmp.ne.s32.totalorder %s97, %s113
    %p115 = scmp.eq.s32.totalorder %s16, 0
    %p116 = por %p114, %p115
    %p117 = scmp.le.s32.totalorder 1, %s10
    %p118 = scmp.lt.s32.totalorder %s10, 4
    %p119 = pnand %p117, %p118
    %p120 = pneg %p119
    // Predicated region
    $region9: #{sa_mlp_pallas.3} parent=5 // pred_check
      _
    $region10: #{sa_mlp_pallas.3} parent=5 // pred_check_branch
      %122 = sbr.rel (%p119) target = $region12
    $region11: #{sa_mlp_pallas.3} parent=5 // pred_region
      %s123 = ssub.s32 %s10, 1
      // Predicated region
      $region13: #{sa_mlp_pallas.3} parent=11 // pred_check
        %p124 = pneg %p57
      $region14: #{sa_mlp_pallas.3} parent=11 // pred_check_branch
        %126 = sbr.rel (%p124) target = $region16
      $region15: #{sa_mlp_pallas.3} parent=11 // pred_region
        _
      $region16: #{sa_mlp_pallas.3} parent=11 // pred_fallthru
        _
    $region12: #{sa_mlp_pallas.3} parent=5 // pred_fallthru
      _
    %p127 = scmp.lt.s32.totalorder %s10, 3
    // Predicated region
    $region17: #{sa_mlp_pallas.3} parent=5 // pred_check
      %p128 = pneg %p127
    $region18: #{sa_mlp_pallas.3} parent=5 // pred_check_branch
      %130 = sbr.rel (%p128) target = $region20
    $region19: #{sa_mlp_pallas.3} parent=5 // pred_region
      // Predicated region
      $region21: #{sa_mlp_pallas.3} parent=19 // pred_check
        %p131 = pneg %p30
      $region22: #{sa_mlp_pallas.3} parent=19 // pred_check_branch
        %133 = sbr.rel (%p131) target = $region24
      $region23: #{sa_mlp_pallas.3} parent=19 // pred_region
        %s134 = smul.u32 16, %s10
        %p135 = scmp.lt.s32.totalorder %s134, 47
        %s136 = scalar_select %p135, %s134, 47
        %s137 = smul.addr %s136, 4
        %s138 = scalar_lea.vmem %s0, %s137
        %s139 = smul.u32 16, %s10
      $region24: #{sa_mlp_pallas.3} parent=19 // pred_fallthru
        _
    $region20: #{sa_mlp_pallas.3} parent=5 // pred_fallthru
      _
    %p140 = scmp.le.s32.totalorder 1, %s10
    %p141 = scmp.lt.s32.totalorder %s10, 4
    %p142 = pnand %p140, %p141
    %p143 = pneg %p142
    // Predicated region
    $region25: #{sa_mlp_pallas.3} parent=5 // pred_check
      _
    $region26: #{sa_mlp_pallas.3} parent=5 // pred_check_branch
      %145 = sbr.rel (%p142) target = $region28
    $region27: #{sa_mlp_pallas.3} parent=5 // pred_region
      %s146 = ssub.s32 %s10, 1
      %s147 = smul.u32 16, %s15
      %p148 = scmp.lt.s32.totalorder %s147, 47
      %s149 = scalar_select %p148, %s147, 47
      %s150 = smul.addr %s149, 4
      %s151 = scalar_lea.vmem %s0, %s150
      %p152 = pneg %p36
      %p153 = pneg %p33
      %p154 = pneg %p57
      %p155 = pneg %p54
      %p156 = pneg %p83
      %p157 = pneg %p80
      %s158 = smul.u32 16, %s15
      %p159 = scmp.lt.s32.totalorder %s158, 47
      %s160 = scalar_select %p159, %s158, 47
      %s161 = smul.addr %s160, 4
      %s162 = scalar_lea.vmem %s2, %s161
      %p163 = pneg %p109
      %p164 = pneg %p106
      %p165 = scmp.lt.s32.totalorder %s15, 2
      %s166 = scalar_select %p165, %s15, 2
      %s167 = smul.addr %s166, 8
      %s168 = scalar_lea.vmem %s3, %s167
      %s169 = smul.u32 16, %s15
      %p170 = scmp.lt.s32.totalorder %s169, 47
      %s171 = scalar_select %p170, %s169, 47
      %s172 = smul.addr %s171, 4
      %s173 = scalar_lea.vmem %s0, %s172
      %s174 = smul.u32 16, %s15
      %s175 = smul.u32 16, %s15
      %p176 = scmp.lt.s32.totalorder %s175, 47
      %s177 = scalar_select %p176, %s175, 47
      %s178 = smul.addr %s177, 4
      %s179 = scalar_lea.vmem %s2, %s178
      %s180 = smul.u32 16, %s15
      %p181 = scmp.lt.s32.totalorder %s15, 2
      %s182 = scalar_select %p181, %s15, 2
      %s183 = smul.addr %s182, 8
      %s184 = scalar_lea.vmem %s3, %s183
      %v186 = vld [vmem:[%s173] sm:$0xf]
      %v187 = vld [vmem:[%s173 + $0x4] sm:$0xf]
      %v188 = vld [vmem:[%s173 + $0x8] sm:$0xf]
      %v189 = vld [vmem:[%s173 + $0xc] sm:$0xf]
      %v190 = vld [vmem:[%s173 + $0x10] sm:$0xf]
      %v191 = vld [vmem:[%s173 + $0x14] sm:$0xf]
      %v192 = vld [vmem:[%s173 + $0x18] sm:$0xf]
      %v193 = vld [vmem:[%s173 + $0x1c] sm:$0xf]
      %v194 = vld [vmem:[%s173 + $0x20] sm:$0xf]
      %v195 = vld [vmem:[%s173 + $0x24] sm:$0xf]
      %v196 = vld [vmem:[%s173 + $0x28] sm:$0xf]
      %v197 = vld [vmem:[%s173 + $0x2c] sm:$0xf]
      %v198 = vld [vmem:[%s173 + $0x30] sm:$0xf]
      %v199 = vld [vmem:[%s173 + $0x34] sm:$0xf]
      %v200 = vld [vmem:[%s173 + $0x38] sm:$0xf]
      %v201 = vld [vmem:[%s173 + $0x3c] sm:$0xf]
      %v202 = vld [vmem:[%s1] sm:$0xf]
      %v203 = vld [vmem:[%s1 + $0x4] sm:$0xf]
      %v220 = vunpack.c.l.b16 %v186
      %v221 = vunpack.c.l.b16 %v187
      %v222 = vunpack.c.l.b16 %v188
      %v223 = vunpack.c.l.b16 %v189
      %v224 = vunpack.c.l.b16 %v190
      %v225 = vunpack.c.l.b16 %v191
      %v226 = vunpack.c.l.b16 %v192
      %v227 = vunpack.c.l.b16 %v193
      %v228 = vunpack.c.l.b16 %v194
      %v229 = vunpack.c.l.b16 %v195
      %v230 = vunpack.c.l.b16 %v196
      %v231 = vunpack.c.l.b16 %v197
      %v232 = vunpack.c.l.b16 %v198
      %v233 = vunpack.c.l.b16 %v199
      %v234 = vunpack.c.l.b16 %v200
      %v235 = vunpack.c.l.b16 %v201
      %v236 = vpack.c.b16 %v221, %v220
      %v237 = vpack.c.b16 %v223, %v222
      %v238 = vpack.c.b16 %v225, %v224
      %v239 = vpack.c.b16 %v227, %v226
      %v240 = vpack.c.b16 %v229, %v228
      %v241 = vpack.c.b16 %v231, %v230
      %v242 = vpack.c.b16 %v233, %v232
      %v243 = vpack.c.b16 %v235, %v234
      %v246 = vunpack.c.l.b16 %v202
      %v247 = vunpack.c.l.b16 %v203
      %v248 = vpack.c.b16 %v247, %v246
      %vm250 = vcmask 130048
      %v252 = vsel %vm250, %v236, 0
      %v255 = vsel %vm250, %v237, 0
      %v258 = vsel %vm250, %v238, 0
      %v261 = vsel %vm250, %v239, 0
      %v264 = vsel %vm250, %v240, 0
      %v267 = vsel %vm250, %v241, 0
      %v270 = vsel %vm250, %v242, 0
      %v273 = vsel %vm250, %v243, 0
      %275 = vmatprep.subr.bf16.mxu0 0
      %276 = vmatpush1.bf16.msra.mxu0 0
      %277 = vmatprep.subr.bf16.mxu0 0
      %278 = vmatpush1.bf16.msra.mxu0 0
      %279 = vmatprep.subr.bf16.mxu0 0
      %280 = vmatpush1.bf16.msra.mxu0 0
      %281 = vmatprep.subr.bf16.mxu0 0
      %282 = vmatpush1.bf16.msra.mxu0 0
      %283 = vmatprep.subr.bf16.mxu0 0
      %284 = vmatpush1.bf16.msra.mxu0 0
      %285 = vmatprep.subr.bf16.mxu0 0
      %286 = vmatpush1.bf16.msra.mxu0 0
      %287 = vmatprep.subr.bf16.mxu0 0
      %288 = vmatpush1.bf16.msra.mxu0 0
      %289 = vmatprep.subr.bf16.mxu0 0
      %290 = vmatpush1.bf16.msra.mxu0 %v248
      %291 = vmatprep.subr.bf16.mxu0 0
      %292 = vmatpush2.bf16.msra.mxu0 0
      %293 = vmatprep.subr.bf16.mxu0 0
      %294 = vmatpush2.bf16.msra.mxu0 0
      %295 = vmatprep.subr.bf16.mxu0 0
      %296 = vmatpush2.bf16.msra.mxu0 0
      %297 = vmatprep.subr.bf16.mxu0 0
      %298 = vmatpush2.bf16.msra.mxu0 0
      %299 = vmatprep.subr.bf16.mxu0 0
      %300 = vmatpush2.bf16.msra.mxu0 0
      %301 = vmatprep.subr.bf16.mxu0 0
      %302 = vmatpush2.bf16.msra.mxu0 0
      %303 = vmatprep.subr.bf16.mxu0 0
      %304 = vmatpush2.bf16.msra.mxu0 0
      %305 = vmatprep.subr.bf16.mxu0 0
      %306 = vmatpush2.bf16.msra.mxu0 0
      %307 = vmatprep.mubr.bf16.mxu0 0
      %308 = vmatmul.mubr.bf16.gmra.mxu0 %v252
      %v309 = vpop.f32.mrf.mxu0
      %v310 = vadd.f32 0.0, %v309
      %v311 = vpop.f32.mrf.mxu0
      %v312 = vpop.f32.mrf.mxu0
      %v313 = vadd.f32 0.0, %v312
      %v314 = vpop.f32.mrf.mxu0
      %315 = vmatprep.mubr.bf16.mxu0 0
      %316 = vmatmul.mubr.bf16.gmra.mxu0 %v255
      %v317 = vpop.f32.mrf.mxu0
      %v318 = vadd.f32 0.0, %v317
      %v319 = vpop.f32.mrf.mxu0
      %v320 = vpop.f32.mrf.mxu0
      %v321 = vadd.f32 0.0, %v320
      %v322 = vpop.f32.mrf.mxu0
      %323 = vmatprep.mubr.bf16.mxu0 0
      %324 = vmatmul.mubr.bf16.gmra.mxu0 %v258
      %v325 = vpop.f32.mrf.mxu0
      %v326 = vadd.f32 0.0, %v325
      %v327 = vpop.f32.mrf.mxu0
      %v328 = vpop.f32.mrf.mxu0
      %v329 = vadd.f32 0.0, %v328
      %v330 = vpop.f32.mrf.mxu0
      %331 = vmatprep.mubr.bf16.mxu0 0
      %332 = vmatmul.mubr.bf16.gmra.mxu0 %v261
      %v333 = vpop.f32.mrf.mxu0
      %v334 = vadd.f32 0.0, %v333
      %v335 = vpop.f32.mrf.mxu0
      %v336 = vpop.f32.mrf.mxu0
      %v337 = vadd.f32 0.0, %v336
      %v338 = vpop.f32.mrf.mxu0
      %339 = vmatprep.mubr.bf16.mxu0 0
      %340 = vmatmul.mubr.bf16.gmra.mxu0 %v264
      %v341 = vpop.f32.mrf.mxu0
      %v342 = vadd.f32 0.0, %v341
      %v343 = vpop.f32.mrf.mxu0
      %v344 = vpop.f32.mrf.mxu0
      %v345 = vadd.f32 0.0, %v344
      %v346 = vpop.f32.mrf.mxu0
      %347 = vmatprep.mubr.bf16.mxu0 0
      %348 = vmatmul.mubr.bf16.gmra.mxu0 %v267
      %v349 = vpop.f32.mrf.mxu0
      %v350 = vadd.f32 0.0, %v349
      %v351 = vpop.f32.mrf.mxu0
      %v352 = vpop.f32.mrf.mxu0
      %v353 = vadd.f32 0.0, %v352
      %v354 = vpop.f32.mrf.mxu0
      %355 = vmatprep.mubr.bf16.mxu0 0
      %356 = vmatmul.mubr.bf16.gmra.mxu0 %v270
      %v357 = vpop.f32.mrf.mxu0
      %v358 = vadd.f32 0.0, %v357
      %v359 = vpop.f32.mrf.mxu0
      %v360 = vpop.f32.mrf.mxu0
      %v361 = vadd.f32 0.0, %v360
      %v362 = vpop.f32.mrf.mxu0
      %363 = vmatprep.mubr.bf16.mxu0 0
      %364 = vmatmul.mubr.bf16.gmra.mxu0 %v273
      %v365 = vpop.f32.mrf.mxu0
      %v366 = vadd.f32 0.0, %v365
      %v367 = vpop.f32.mrf.mxu0
      %v368 = vpop.f32.mrf.mxu0
      %v369 = vadd.f32 0.0, %v368
      %v370 = vpop.f32.mrf.mxu0
      %371 = vdwg.mxu0
      %v372 = vpack.c.bf16 %v313, %v310
      %v373 = vpack.c.bf16 %v321, %v318
      %v374 = vpack.c.bf16 %v329, %v326
      %v375 = vpack.c.bf16 %v337, %v334
      %v376 = vpack.c.bf16 %v345, %v342
      %v377 = vpack.c.bf16 %v353, %v350
      %v378 = vpack.c.bf16 %v361, %v358
      %v379 = vpack.c.bf16 %v369, %v366
      %v388 = vunpack.c.l.b16 %v372
      %v389 = vunpack.c.h.b16 %v372
      %v390 = vunpack.c.l.b16 %v373
      %v391 = vunpack.c.h.b16 %v373
      %v392 = vunpack.c.l.b16 %v374
      %v393 = vunpack.c.h.b16 %v374
      %v394 = vunpack.c.l.b16 %v375
      %v395 = vunpack.c.h.b16 %v375
      %v396 = vunpack.c.l.b16 %v376
      %v397 = vunpack.c.h.b16 %v376
      %v398 = vunpack.c.l.b16 %v377
      %v399 = vunpack.c.h.b16 %v377
      %v400 = vunpack.c.l.b16 %v378
      %v401 = vunpack.c.h.b16 %v378
      %v402 = vunpack.c.l.b16 %v379
      %v403 = vunpack.c.h.b16 %v379
      %v404 = vpack.c.b16 %v388, %v388
      %v405 = vpack.c.b16 %v389, %v389
      %v406 = vpack.c.b16 %v390, %v390
      %v407 = vpack.c.b16 %v391, %v391
      %v408 = vpack.c.b16 %v392, %v392
      %v409 = vpack.c.b16 %v393, %v393
      %v410 = vpack.c.b16 %v394, %v394
      %v411 = vpack.c.b16 %v395, %v395
      %v412 = vpack.c.b16 %v396, %v396
      %v413 = vpack.c.b16 %v397, %v397
      %v414 = vpack.c.b16 %v398, %v398
      %v415 = vpack.c.b16 %v399, %v399
      %v416 = vpack.c.b16 %v400, %v400
      %v417 = vpack.c.b16 %v401, %v401
      %v418 = vpack.c.b16 %v402, %v402
      %v419 = vpack.c.b16 %v403, %v403
      %436 = vst [vmem:[%s179] sm:$0xf] %v404
      %437 = vst [vmem:[%s179 + $0x4] sm:$0xf] %v405
      %438 = vst [vmem:[%s179 + $0x8] sm:$0xf] %v406
      %439 = vst [vmem:[%s179 + $0xc] sm:$0xf] %v407
      %440 = vst [vmem:[%s179 + $0x10] sm:$0xf] %v408
      %441 = vst [vmem:[%s179 + $0x14] sm:$0xf] %v409
      %442 = vst [vmem:[%s179 + $0x18] sm:$0xf] %v410
      %443 = vst [vmem:[%s179 + $0x1c] sm:$0xf] %v411
      %444 = vst [vmem:[%s179 + $0x20] sm:$0xf] %v412
      %445 = vst [vmem:[%s179 + $0x24] sm:$0xf] %v413
      %446 = vst [vmem:[%s179 + $0x28] sm:$0xf] %v414
      %447 = vst [vmem:[%s179 + $0x2c] sm:$0xf] %v415
      %448 = vst [vmem:[%s179 + $0x30] sm:$0xf] %v416
      %449 = vst [vmem:[%s179 + $0x34] sm:$0xf] %v417
      %450 = vst [vmem:[%s179 + $0x38] sm:$0xf] %v418
      %451 = vst [vmem:[%s179 + $0x3c] sm:$0xf] %v419
      %p452 = scmp.eq.s32.totalorder %s15, 2
      // Predicated region
      $region29: #{sa_mlp_pallas.3} parent=27 // pred_check
        %p453 = pneg %p452
      $region30: #{sa_mlp_pallas.3} parent=27 // pred_check_branch
        %455 = sbr.rel (%p453) target = $region32
      $region31: #{sa_mlp_pallas.3} parent=27 // pred_region
        %v456 = vlaneseq
        %v457 = vshrl.u32 %v456, 7
        %v458 = vadd.s32 %v457, 8
        %v459 = vadd.s32 %v457, 16
        %v460 = vadd.s32 %v457, 24
        %v461 = vadd.s32 %v457, 32
        %v462 = vadd.s32 %v457, 40
        %v463 = vadd.s32 %v457, 48
        %v464 = vadd.s32 %v457, 56
        %v465 = vadd.s32 %v457, 64
        %v466 = vadd.s32 %v457, 72
        %v467 = vadd.s32 %v457, 80
        %v468 = vadd.s32 %v457, 88
        %v469 = vadd.s32 %v457, 96
        %v470 = vadd.s32 %v457, 104
        %v471 = vadd.s32 %v457, 112
        %v472 = vadd.s32 %v457, 120
        %s473 = smul.u32 %s15, 128
        %v474 = vstv %s473
        %v475 = vadd.s32 %v457, %v474
        %v476 = vadd.s32 %v458, %v474
        %v477 = vadd.s32 %v459, %v474
        %v478 = vadd.s32 %v460, %v474
        %v479 = vadd.s32 %v461, %v474
        %v480 = vadd.s32 %v462, %v474
        %v481 = vadd.s32 %v463, %v474
        %v482 = vadd.s32 %v464, %v474
        %v483 = vadd.s32 %v465, %v474
        %v484 = vadd.s32 %v466, %v474
        %v485 = vadd.s32 %v467, %v474
        %v486 = vadd.s32 %v468, %v474
        %v487 = vadd.s32 %v469, %v474
        %v488 = vadd.s32 %v470, %v474
        %v489 = vadd.s32 %v471, %v474
        %v490 = vadd.s32 %v472, %v474
        %vm491 = vcmp.lt.s32.totalorder %v475, 320
        %vm492 = vcmp.lt.s32.totalorder %v476, 320
        %vm493 = vcmp.lt.s32.totalorder %v477, 320
        %vm494 = vcmp.lt.s32.totalorder %v478, 320
        %vm495 = vcmp.lt.s32.totalorder %v479, 320
        %vm496 = vcmp.lt.s32.totalorder %v480, 320
        %vm497 = vcmp.lt.s32.totalorder %v481, 320
        %vm498 = vcmp.lt.s32.totalorder %v482, 320
        %vm499 = vcmp.lt.s32.totalorder %v483, 320
        %vm500 = vcmp.lt.s32.totalorder %v484, 320
        %vm501 = vcmp.lt.s32.totalorder %v485, 320
        %vm502 = vcmp.lt.s32.totalorder %v486, 320
        %vm503 = vcmp.lt.s32.totalorder %v487, 320
        %vm504 = vcmp.lt.s32.totalorder %v488, 320
        %vm505 = vcmp.lt.s32.totalorder %v489, 320
        %vm506 = vcmp.lt.s32.totalorder %v490, 320
        %v507 = vsel %vm491, 1, 0
        %v508 = vsel %vm492, 1, 0
        %v509 = vsel %vm493, 1, 0
        %v510 = vsel %vm494, 1, 0
        %v511 = vsel %vm495, 1, 0
        %v512 = vsel %vm496, 1, 0
        %v513 = vsel %vm497, 1, 0
        %v514 = vsel %vm498, 1, 0
        %v515 = vsel %vm499, 1, 0
        %v516 = vsel %vm500, 1, 0
        %v517 = vsel %vm501, 1, 0
        %v518 = vsel %vm502, 1, 0
        %v519 = vsel %vm503, 1, 0
        %v520 = vsel %vm504, 1, 0
        %v521 = vsel %vm505, 1, 0
        %v522 = vsel %vm506, 1, 0
        %v523 = vcvt.s32.f32 %v507
        %v524 = vcvt.s32.f32 %v508
        %v525 = vcvt.s32.f32 %v509
        %v526 = vcvt.s32.f32 %v510
        %v527 = vcvt.s32.f32 %v511
        %v528 = vcvt.s32.f32 %v512
        %v529 = vcvt.s32.f32 %v513
        %v530 = vcvt.s32.f32 %v514
        %v531 = vcvt.s32.f32 %v515
        %v532 = vcvt.s32.f32 %v516
        %v533 = vcvt.s32.f32 %v517
        %v534 = vcvt.s32.f32 %v518
        %v535 = vcvt.s32.f32 %v519
        %v536 = vcvt.s32.f32 %v520
        %v537 = vcvt.s32.f32 %v521
        %v538 = vcvt.s32.f32 %v522
        %v539 = vmul.f32 %v310, %v523
        %v540 = vmul.f32 %v313, %v524
        %v541 = vmul.f32 %v318, %v525
        %v542 = vmul.f32 %v321, %v526
        %v543 = vmul.f32 %v326, %v527
        %v544 = vmul.f32 %v329, %v528
        %v545 = vmul.f32 %v334, %v529
        %v546 = vmul.f32 %v337, %v530
        %v547 = vmul.f32 %v342, %v531
        %v548 = vmul.f32 %v345, %v532
        %v549 = vmul.f32 %v350, %v533
        %v550 = vmul.f32 %v353, %v534
        %v551 = vmul.f32 %v358, %v535
        %v552 = vmul.f32 %v361, %v536
        %v553 = vmul.f32 %v366, %v537
        %v554 = vmul.f32 %v369, %v538
        %v555 = vadd.f32 %v539, %v540
        %v556 = vadd.f32 %v555, %v541
        %v557 = vadd.f32 %v556, %v542
        %v558 = vadd.f32 %v557, %v543
        %v559 = vadd.f32 %v558, %v544
        %v560 = vadd.f32 %v559, %v545
        %v561 = vadd.f32 %v560, %v546
        %v562 = vadd.f32 %v561, %v547
        %v563 = vadd.f32 %v562, %v548
        %v564 = vadd.f32 %v563, %v549
        %v565 = vadd.f32 %v564, %v550
        %v566 = vadd.f32 %v565, %v551
        %v567 = vadd.f32 %v566, %v552
        %v568 = vadd.f32 %v567, %v553
        %v569 = vadd.f32 %v568, %v554
        %v570 = vrot.slane %v569, 4
        %v571 = vadd.f32 %v569, %v570
        %v572 = vrot.slane %v571, 2
        %v573 = vadd.f32 %v571, %v572
        %v574 = vrot.slane %v573, 1
        %v575 = vadd.f32 %v573, %v574
        %576 = vst [vmem:[%s184] sm:$0x1] %v575
        %v577 = vmul.f32 %v539, %v539
        %v578 = vmul.f32 %v540, %v540
        %v579 = vmul.f32 %v541, %v541
        %v580 = vmul.f32 %v542, %v542
        %v581 = vmul.f32 %v543, %v543
        %v582 = vmul.f32 %v544, %v544
        %v583 = vmul.f32 %v545, %v545
        %v584 = vmul.f32 %v546, %v546
        %v585 = vmul.f32 %v547, %v547
        %v586 = vmul.f32 %v548, %v548
        %v587 = vmul.f32 %v549, %v549
        %v588 = vmul.f32 %v550, %v550
        %v589 = vmul.f32 %v551, %v551
        %v590 = vmul.f32 %v552, %v552
        %v591 = vmul.f32 %v553, %v553
        %v592 = vmul.f32 %v554, %v554
        %v593 = vadd.f32 %v577, %v578
        %v594 = vadd.f32 %v593, %v579
        %v595 = vadd.f32 %v594, %v580
        %v596 = vadd.f32 %v595, %v581
        %v597 = vadd.f32 %v596, %v582
        %v598 = vadd.f32 %v597, %v583
        %v599 = vadd.f32 %v598, %v584
        %v600 = vadd.f32 %v599, %v585
        %v601 = vadd.f32 %v600, %v586
        %v602 = vadd.f32 %v601, %v587
        %v603 = vadd.f32 %v602, %v588
        %v604 = vadd.f32 %v603, %v589
        %v605 = vadd.f32 %v604, %v590
        %v606 = vadd.f32 %v605, %v591
        %v607 = vadd.f32 %v606, %v592
        %v608 = vrot.slane %v607, 4
        %v609 = vadd.f32 %v607, %v608
        %v610 = vrot.slane %v609, 2
        %v611 = vadd.f32 %v609, %v610
        %v612 = vrot.slane %v611, 1
        %v613 = vadd.f32 %v611, %v612
        %614 = vst [vmem:[%s184 + $0x1] sm:$0x1] %v613
      $region32: #{sa_mlp_pallas.3} parent=27 // pred_fallthru
        _
      %p615 = scmp.lt.s32.totalorder %s15, 2
      // Predicated region
      $region33: #{sa_mlp_pallas.3} parent=27 // pred_check
        %p616 = pneg %p615
      $region34: #{sa_mlp_pallas.3} parent=27 // pred_check_branch
        %618 = sbr.rel (%p616) target = $region36
      $region35: #{sa_mlp_pallas.3} parent=27 // pred_region
        %v619 = vadd.f32 %v310, %v313
        %v620 = vadd.f32 %v619, %v318
        %v621 = vadd.f32 %v620, %v321
        %v622 = vadd.f32 %v621, %v326
        %v623 = vadd.f32 %v622, %v329
        %v624 = vadd.f32 %v623, %v334
        %v625 = vadd.f32 %v624, %v337
        %v626 = vadd.f32 %v625, %v342
        %v627 = vadd.f32 %v626, %v345
        %v628 = vadd.f32 %v627, %v350
        %v629 = vadd.f32 %v628, %v353
        %v630 = vadd.f32 %v629, %v358
        %v631 = vadd.f32 %v630, %v361
        %v632 = vadd.f32 %v631, %v366
        %v633 = vadd.f32 %v632, %v369
        %v634 = vrot.slane %v633, 4
        %v635 = vadd.f32 %v633, %v634
        %v636 = vrot.slane %v635, 2
        %v637 = vadd.f32 %v635, %v636
        %v638 = vrot.slane %v637, 1
        %v639 = vadd.f32 %v637, %v638
        %640 = vst [vmem:[%s184] sm:$0x1] %v639
        %v641 = vmul.f32 %v310, %v310
        %v642 = vmul.f32 %v313, %v313
        %v643 = vmul.f32 %v318, %v318
        %v644 = vmul.f32 %v321, %v321
        %v645 = vmul.f32 %v326, %v326
        %v646 = vmul.f32 %v329, %v329
        %v647 = vmul.f32 %v334, %v334
        %v648 = vmul.f32 %v337, %v337
        %v649 = vmul.f32 %v342, %v342
        %v650 = vmul.f32 %v345, %v345
        %v651 = vmul.f32 %v350, %v350
        %v652 = vmul.f32 %v353, %v353
        %v653 = vmul.f32 %v358, %v358
        %v654 = vmul.f32 %v361, %v361
        %v655 = vmul.f32 %v366, %v366
        %v656 = vmul.f32 %v369, %v369
        %v657 = vadd.f32 %v641, %v642
        %v658 = vadd.f32 %v657, %v643
        %v659 = vadd.f32 %v658, %v644
        %v660 = vadd.f32 %v659, %v645
        %v661 = vadd.f32 %v660, %v646
        %v662 = vadd.f32 %v661, %v647
        %v663 = vadd.f32 %v662, %v648
        %v664 = vadd.f32 %v663, %v649
        %v665 = vadd.f32 %v664, %v650
        %v666 = vadd.f32 %v665, %v651
        %v667 = vadd.f32 %v666, %v652
        %v668 = vadd.f32 %v667, %v653
        %v669 = vadd.f32 %v668, %v654
        %v670 = vadd.f32 %v669, %v655
        %v671 = vadd.f32 %v670, %v656
        %v672 = vrot.slane %v671, 4
        %v673 = vadd.f32 %v671, %v672
        %v674 = vrot.slane %v673, 2
        %v675 = vadd.f32 %v673, %v674
        %v676 = vrot.slane %v675, 1
        %v677 = vadd.f32 %v675, %v676
        %678 = vst [vmem:[%s184 + $0x1] sm:$0x1] %v677
      $region36: #{sa_mlp_pallas.3} parent=27 // pred_fallthru
        _
      %s679 = smul.u32 16, %s15
      %p680 = scmp.lt.s32.totalorder %s679, 47
      %s681 = scalar_select %p680, %s679, 47
      %s682 = smul.addr %s681, 4
      %s683 = scalar_lea.vmem %s2, %s682
      %p684 = scmp.lt.s32.totalorder %s15, 2
      %s685 = scalar_select %p684, %s15, 2
      %s686 = smul.addr %s685, 8
      %s687 = scalar_lea.vmem %s3, %s686
      // Predicated region
      $region37: #{sa_mlp_pallas.3} parent=27 // pred_check
        %p688 = pneg %p80
      $region38: #{sa_mlp_pallas.3} parent=27 // pred_check_branch
        %690 = sbr.rel (%p688) target = $region40
      $region39: #{sa_mlp_pallas.3} parent=27 // pred_region
        %s691 = smul.u32 16, %s15
      $region40: #{sa_mlp_pallas.3} parent=27 // pred_fallthru
        _
      // Predicated region
      $region41: #{sa_mlp_pallas.3} parent=27 // pred_check
        %p692 = pneg %p106
      $region42: #{sa_mlp_pallas.3} parent=27 // pred_check_branch
        %694 = sbr.rel (%p692) target = $region44
      $region43: #{sa_mlp_pallas.3} parent=27 // pred_region
        _
      $region44: #{sa_mlp_pallas.3} parent=27 // pred_fallthru
        _
    $region28: #{sa_mlp_pallas.3} parent=5 // pred_fallthru
      _
    %p695 = scmp.le.s32.totalorder 2, %s10
    // Predicated region
    $region45: #{sa_mlp_pallas.3} parent=5 // pred_check
      %p696 = pneg %p695
    $region46: #{sa_mlp_pallas.3} parent=5 // pred_check_branch
      %698 = sbr.rel (%p696) target = $region48
    $region47: #{sa_mlp_pallas.3} parent=5 // pred_region
      %s699 = ssub.s32 %s10, 2
      // Predicated region
      $region49: #{sa_mlp_pallas.3} parent=47 // pred_check
        %p700 = pneg %p86
      $region50: #{sa_mlp_pallas.3} parent=47 // pred_check_branch
        %702 = sbr.rel (%p700) target = $region52
      $region51: #{sa_mlp_pallas.3} parent=47 // pred_region
        %s703 = smul.u32 16, %s16
        %p704 = scmp.lt.s32.totalorder %s703, 47
        %s705 = scalar_select %p704, %s703, 47
        %s706 = smul.addr %s705, 4
        %s707 = scalar_lea.vmem %s2, %s706
      $region52: #{sa_mlp_pallas.3} parent=47 // pred_fallthru
        _
      // Predicated region
      $region53: #{sa_mlp_pallas.3} parent=47 // pred_check
        %p708 = pneg %p112
      $region54: #{sa_mlp_pallas.3} parent=47 // pred_check_branch
        %710 = sbr.rel (%p708) target = $region56
      $region55: #{sa_mlp_pallas.3} parent=47 // pred_region
        %p711 = scmp.lt.s32.totalorder %s16, 2
        %s712 = scalar_select %p711, %s16, 2
        %s713 = smul.addr %s712, 8
        %s714 = scalar_lea.vmem %s3, %s713
      $region56: #{sa_mlp_pallas.3} parent=47 // pred_fallthru
        _
    $region48: #{sa_mlp_pallas.3} parent=5 // pred_fallthru
      _
  $region6: #{sa_mlp_pallas.3} parent=0 // loop_footer
    %s14 = sadd.s32 1, %s10
  $region7: #{sa_mlp_pallas.3} parent=0 // loop_footer_branch
    %9 = sbr.rel target = $region3
  $region8: #{sa_mlp_pallas.3} parent=0 // loop_exit
    _

</llo_original>
